<compile_context>
chip_gen: v7x
topology: tpu7x:2x2x1
jax: 0.10.0
libtpu: 0.0.40
codegen_flags: <defaults>
</compile_context>

<pallas_src>
import numpy as np
import jax
import jax.numpy as jnp
from jax import lax
from jax.experimental import pallas as pl
from jax.experimental.pallas import tpu as pltpu


_OUT_LANES = 128


def _make_kernel(anch_np, num_rot):
    # Anchors become inlined scalar immediates — zero extra operands/DMAs.
    anch_rows = [tuple(float(v) for v in anch_np[j]) for j in range(num_rot)]

    def kernel(small_ref,   # VMEM (bs*num_rot, 8)    f32  [q0,q1,q2,q3, c, diam, 0, 0]
               pts_ref,     # VMEM (6, bs*num_rot, P) f32  rows: mx,my,mz,tx,ty,tz (per-rot replicated)
               predt_ref,   # VMEM (bs*n_sel, 4)      f32  [pred_x, pred_y, pred_z, choose (as f32)]
               tt_ref,      # VMEM (bs*3, H*W)        f32  target_t channel-first
               out_ref):    # VMEM (8, 128)           f32  rows: total, loss_r, loss_reg, loss_t, 0...
        f32 = jnp.float32
        R = small_ref.shape[0]                 # bs * num_rot
        bs = R // num_rot
        P = pts_ref.shape[2]
        n_sel = predt_ref.shape[0] // bs
        HW = tt_ref.shape[1]

        small = small_ref[...]
        q0 = small[:, 0:1]; q1 = small[:, 1:2]; q2 = small[:, 2:3]; q3 = small[:, 3:4]
        c = small[:, 4:5]; diam = small[:, 5:6]

        # ---- regularization term: cos columns from scalar anchor constants ----
        # diag picked out with an iota row-index mask (no constant arrays).
        ridx = lax.broadcasted_iota(jnp.int32, (R, 1), 0)
        max_cos = None
        diag = jnp.zeros((R, 1), f32)
        for j in range(num_rot):
            a0, a1, a2, a3 = anch_rows[j]
            col = a0 * q0 + a1 * q1 + a2 * q2 + a3 * q3          # (R, 1)
            max_cos = col if max_cos is None else jnp.maximum(max_cos, col)
            mask = ridx == j
            for b in range(1, bs):
                mask = jnp.logical_or(mask, ridx == b * num_rot + j)
            diag = diag + jnp.where(mask, col, 0.0)
        gap = max_cos - diag
        thr = jnp.where(gap > 0.001, gap, 0.0)                   # F.threshold(x, 0.001, 0)
        loss_reg = jnp.sum(thr, keepdims=True) * (1.0 / (bs * num_rot))   # (1, 1)

        # ---- rotation term: fully vectorized over bs*num_rot rows (VPU only) ----
        r00 = 1.0 - 2.0 * (q2 * q2 + q3 * q3)
        r01 = 2.0 * q1 * q2 - 2.0 * q0 * q3
        r02 = 2.0 * q0 * q2 + 2.0 * q1 * q3
        r10 = 2.0 * q1 * q2 + 2.0 * q3 * q0
        r11 = 1.0 - 2.0 * (q1 * q1 + q3 * q3)
        r12 = -2.0 * q0 * q1 + 2.0 * q2 * q3
        r20 = -2.0 * q0 * q2 + 2.0 * q1 * q3
        r21 = 2.0 * q0 * q1 + 2.0 * q2 * q3
        r22 = 1.0 - 2.0 * (q1 * q1 + q2 * q2)

        mx = pts_ref[0]; my = pts_ref[1]; mz = pts_ref[2]        # (R, P)
        tx = pts_ref[3]; ty = pts_ref[4]; tz = pts_ref[5]
        # pred point = R @ point  (== model_points @ rotations.transpose(3, 2))
        px = r00 * mx + r01 * my + r02 * mz
        py = r10 * mx + r11 * my + r12 * mz
        pz = r20 * mx + r21 * my + r22 * mz
        dx = px - tx; dy = py - ty; dz = pz - tz
        dist = jnp.sqrt(dx * dx + dy * dy + dz * dz)             # (R, P)
        per_rot = jnp.mean(dist, axis=1, keepdims=True)          # (R, 1)
        obj = per_rot / (diam * c) + jnp.log(c)
        loss_r = jnp.sum(obj, keepdims=True) * (1.0 / num_rot)   # summed over batch, /num_rot

        # ---- translation term: in-kernel `choose` gather via one-hot lane mask ----
        iota_hw = lax.broadcasted_iota(jnp.int32, (n_sel, HW), 1).astype(f32)  # hoisted
        lt_sum = jnp.zeros((1, 1), f32)
        for b in range(bs):
            ch_col = predt_ref[b * n_sel:(b + 1) * n_sel, 3:4]   # choose as f32, exact
            oh = (iota_hw == ch_col).astype(f32)                 # (n_sel, HW)
            for ch in range(3):
                tt_row = tt_ref[b * 3 + ch: b * 3 + ch + 1, :]   # (1, HW)
                sel = jnp.sum(oh * tt_row, axis=1, keepdims=True)        # (n_sel, 1)
                d = predt_ref[b * n_sel:(b + 1) * n_sel, ch:ch + 1] - sel
                ad = jnp.abs(d)
                sl1 = jnp.where(ad < 1.0, 0.5 * d * d, ad - 0.5)          # smooth L1, beta=1
                lt_sum = lt_sum + jnp.sum(sl1, keepdims=True)
        loss_t = lt_sum * (1.0 / (bs * n_sel * 3))

        # ---- single aligned (8,128) store; weighted total computed in-kernel ----
        total = loss_r + 2.0 * loss_reg + 5.0 * loss_t
        rows = lax.broadcasted_iota(jnp.int32, (8, _OUT_LANES), 0)
        out_ref[...] = jnp.where(
            rows == 0, total,
            jnp.where(rows == 1, loss_r,
                      jnp.where(rows == 2, loss_reg,
                                jnp.where(rows == 3, loss_t, 0.0))))

    return kernel


def make_pallas_loss(rot_anchors):
    """Returns a jitted fn(pred_t, pred_r, pred_c, target_r, target_t,
    model_points, choose, diameters) -> (total, loss_r, loss_reg, loss_t)."""
    anch_np = np.asarray(rot_anchors, np.float32)                # (num_rot, 4)
    num_rot = anch_np.shape[0]
    kernel = _make_kernel(anch_np, num_rot)

    @jax.jit
    def loss_fn(pred_t, pred_r, pred_c, target_r, target_t, model_points,
                choose, diameters):
        f32 = jnp.float32
        bs = pred_r.shape[0]
        P = model_points.shape[1]
        n_sel = pred_t.shape[1]
        H, W = target_t.shape[2], target_t.shape[3]
        R = bs * num_rot

        # --- layout glue (fused under this jit) ---
        q = pred_r.astype(f32).reshape(R, 4)
        c = pred_c.astype(f32).reshape(R, 1)
        diam_col = jnp.repeat(diameters.astype(f32).reshape(bs, 1), num_rot, axis=0)
        small = jnp.concatenate([q, c, diam_col, jnp.zeros((R, 2), f32)], axis=1)  # (R, 8)

        # model + GT points, channel-first, replicated per rotation: (6, R, P)
        mp = jnp.transpose(model_points.astype(f32), (0, 2, 1))   # (bs, 3, P)
        tr = jnp.transpose(target_r.astype(f32), (0, 2, 1))       # (bs, 3, P)
        pts_cf = jnp.concatenate([mp, tr], axis=1)                 # (bs, 6, P)
        pts_rep = jnp.transpose(jnp.repeat(pts_cf, num_rot, axis=0), (1, 0, 2))  # (6, R, P)

        # pred_t + choose packed into one buffer; choose values are small ints so
        # the f32 round-trip is exact.
        predt_pack = jnp.concatenate(
            [pred_t.astype(f32).reshape(bs * n_sel, 3),
             choose.astype(f32).reshape(bs * n_sel, 1)], axis=1)   # (bs*n_sel, 4)

        tt = target_t.astype(f32).reshape(bs * 3, H * W)            # (bs*3, HW)

        flops = R * num_rot * 8 + R * P * 30 + bs * 3 * n_sel * H * W * 3
        transcendentals = R * P + R                                  # sqrt + log
        bytes_accessed = 4 * (R * 8 + 6 * R * P + bs * n_sel * 4
                              + bs * 3 * H * W + 8 * _OUT_LANES)

        # NOTE: for bs >> 2 on v7x, add a 1-D "parallel" grid over batch chunks
        # to use the second TensorCore; at bs=2 a grid is pure per-step overhead.
        out = pl.pallas_call(
            kernel,
            out_shape=jax.ShapeDtypeStruct((8, _OUT_LANES), f32),
            in_specs=[pl.BlockSpec(memory_space=pltpu.MemorySpace.VMEM)] * 4,
            out_specs=pl.BlockSpec(memory_space=pltpu.MemorySpace.VMEM),
            cost_estimate=pl.CostEstimate(flops=flops,
                                          transcendentals=transcendentals,
                                          bytes_accessed=bytes_accessed),
        )(small, pts_rep, predt_pack, tt)

        total = out[0, 0]
        loss_r = out[1, 0]
        loss_reg = out[2, 0]
        loss_t = out[3, 0]
        return total, loss_r, loss_reg, loss_t

    return loss_fn


def numpy_reference(pred_t, pred_r, pred_c, target_r, target_t, model_points,
                    choose, diameters, rot_anchors):
    """float64 numpy reference reproducing the torch forward exactly."""
    pred_t = np.asarray(pred_t, np.float64); pred_r = np.asarray(pred_r, np.float64)
    pred_c = np.asarray(pred_c, np.float64); target_r = np.asarray(target_r, np.float64)
    target_t = np.asarray(target_t, np.float64)
    model_points = np.asarray(model_points, np.float64)
    choose = np.asarray(choose); diameters = np.asarray(diameters, np.float64)
    anch = np.asarray(rot_anchors, np.float64)
    bs, num_rot, _ = pred_r.shape

    cos = np.einsum('bak,nk->ban', pred_r, anch)
    gap = cos.max(-1) - np.diagonal(cos, axis1=1, axis2=2)
    thr = np.where(gap > 0.001, gap, 0.0)
    loss_reg = thr.mean()

    q0, q1, q2, q3 = pred_r[..., 0], pred_r[..., 1], pred_r[..., 2], pred_r[..., 3]
    R = np.stack([
        1 - 2 * (q2 ** 2 + q3 ** 2), 2 * q1 * q2 - 2 * q0 * q3, 2 * q0 * q2 + 2 * q1 * q3,
        2 * q1 * q2 + 2 * q3 * q0, 1 - 2 * (q1 ** 2 + q3 ** 2), -2 * q0 * q1 + 2 * q2 * q3,
        -2 * q0 * q2 + 2 * q1 * q3, 2 * q0 * q1 + 2 * q2 * q3, 1 - 2 * (q1 ** 2 + q2 ** 2),
    ], axis=-1).reshape(bs, num_rot, 3, 3)
    Rt = np.swapaxes(R, -1, -2)

    loss_r = 0.0
    for i in range(bs):
        pts = np.einsum('pk,rkj->rpj', model_points[i], Rt[i])       # (num_rot, P, 3)
        dist = np.linalg.norm(pts[:, :, None, :] - target_r[i][None, :, None, :], axis=3)
        dist = dist.min(2)                                           # (num_rot, P)
        loss_r += np.mean(dist.mean(1) / (diameters[i] * pred_c[i]) + np.log(pred_c[i]))

    H, W = target_t.shape[2], target_t.shape[3]
    tt_flat = np.transpose(target_t, (0, 2, 3, 1)).reshape(bs, H * W, 3)
    tgt = np.take_along_axis(tt_flat, choose[..., None], axis=1)
    diff = pred_t - tgt
    ad = np.abs(diff)
    loss_t = np.where(ad < 1.0, 0.5 * diff * diff, ad - 0.5).mean()

    return (loss_r + 2 * loss_reg + 5 * loss_t, loss_r, loss_reg, loss_t)


if __name__ == "__main__":
    bs, num_rot, P, n_sel, H, W = 2, 8, 128, 64, 16, 16

    key = jax.random.PRNGKey(0)
    ks = jax.random.split(key, 9)

    rot_anchors = jax.random.normal(ks[0], (num_rot, 4), jnp.float32)
    rot_anchors = rot_anchors / jnp.linalg.norm(rot_anchors, axis=1, keepdims=True)
    rot_anchors = np.asarray(rot_anchors)

    pred_r = jax.random.normal(ks[1], (bs, num_rot, 4), jnp.float32)
    pred_r = pred_r / jnp.linalg.norm(pred_r, axis=2, keepdims=True)
    pred_c = jax.random.uniform(ks[2], (bs, num_rot), jnp.float32, 0.2, 1.0)
    model_points = 0.05 * jax.random.normal(ks[3], (bs, P, 3), jnp.float32)
    target_r = 0.05 * jax.random.normal(ks[4], (bs, P, 3), jnp.float32)
    pred_t = 0.1 * jax.random.normal(ks[5], (bs, n_sel, 3), jnp.float32)
    target_t = 0.1 * jax.random.normal(ks[6], (bs, 3, H, W), jnp.float32)   # NCHW
    choose = jax.random.randint(ks[7], (bs, n_sel), 0, H * W, jnp.int32)
    diameters = jax.random.uniform(ks[8], (bs,), jnp.float32, 0.1, 0.3)

    loss_fn = make_pallas_loss(rot_anchors)
    total, lr, lreg, lt = loss_fn(pred_t, pred_r, pred_c, target_r, target_t,
                                  model_points, choose, diameters)
    jax.block_until_ready((total, lr, lreg, lt))

    ref_total, ref_lr, ref_lreg, ref_lt = numpy_reference(
        pred_t, pred_r, pred_c, target_r, target_t, model_points, choose,
        diameters, rot_anchors)

    np.testing.assert_allclose(np.array(lr), ref_lr, rtol=5e-4, atol=1e-5)
    np.testing.assert_allclose(np.array(lreg), ref_lreg, rtol=5e-4, atol=1e-5)
    np.testing.assert_allclose(np.array(lt), ref_lt, rtol=5e-4, atol=1e-5)
    np.testing.assert_allclose(np.array(total), ref_total, rtol=5e-4, atol=1e-5)

    print("KERNEL_OK")
</pallas_src>

<mosaic_0001>
module attributes {stable_mosaic.version = 11 : i64} {
  func.func @kernel(%arg0: memref<16x8xf32, #tpu.memory_space<vmem>>, %arg1: memref<6x16x128xf32, #tpu.memory_space<vmem>>, %arg2: memref<128x4xf32, #tpu.memory_space<vmem>>, %arg3: memref<6x256xf32, #tpu.memory_space<vmem>>, %arg4: memref<8x128xf32, #tpu.memory_space<vmem>>) attributes {dimension_semantics = [], scalar_prefetch = 0 : i64, scratch_operands = 0 : i64, tpu.core_type = #tpu.core_type<tc>} {
    %c0 = arith.constant 0 : index
    %c0_0 = arith.constant 0 : index
    %0 = vector.load %arg0[%c0, %c0_0] : memref<16x8xf32, #tpu.memory_space<vmem>>, vector<16x8xf32>
    %1 = vector.extract_strided_slice %0 {offsets = [0, 0], sizes = [16, 1], strides = [1, 1]} : vector<16x8xf32> to vector<16x1xf32>
    %2 = vector.extract_strided_slice %0 {offsets = [0, 1], sizes = [16, 1], strides = [1, 1]} : vector<16x8xf32> to vector<16x1xf32>
    %3 = vector.extract_strided_slice %0 {offsets = [0, 2], sizes = [16, 1], strides = [1, 1]} : vector<16x8xf32> to vector<16x1xf32>
    %4 = vector.extract_strided_slice %0 {offsets = [0, 3], sizes = [16, 1], strides = [1, 1]} : vector<16x8xf32> to vector<16x1xf32>
    %5 = vector.extract_strided_slice %0 {offsets = [0, 4], sizes = [16, 1], strides = [1, 1]} : vector<16x8xf32> to vector<16x1xf32>
    %6 = vector.extract_strided_slice %0 {offsets = [0, 5], sizes = [16, 1], strides = [1, 1]} : vector<16x8xf32> to vector<16x1xf32>
    %7 = tpu.iota {dimensions = array<i32: 0>} : vector<16x1xi32>
    %cst = arith.constant 0.000000e+00 : f32
    %8 = vector.broadcast %cst : f32 to vector<16x1xf32>
    %cst_1 = arith.constant 0.517687619 : f32
    %9 = vector.broadcast %cst_1 : f32 to vector<16x1xf32>
    %10 = arith.mulf %9, %1 : vector<16x1xf32>
    %cst_2 = arith.constant -0.467323571 : f32
    %11 = vector.broadcast %cst_2 : f32 to vector<16x1xf32>
    %12 = arith.mulf %11, %2 : vector<16x1xf32>
    %13 = arith.addf %10, %12 : vector<16x1xf32>
    %cst_3 = arith.constant -0.385770917 : f32
    %14 = vector.broadcast %cst_3 : f32 to vector<16x1xf32>
    %15 = arith.mulf %14, %3 : vector<16x1xf32>
    %16 = arith.addf %13, %15 : vector<16x1xf32>
    %cst_4 = arith.constant -0.603977621 : f32
    %17 = vector.broadcast %cst_4 : f32 to vector<16x1xf32>
    %18 = arith.mulf %17, %4 : vector<16x1xf32>
    %19 = arith.addf %16, %18 : vector<16x1xf32>
    %c0_i32 = arith.constant 0 : i32
    %20 = vector.broadcast %c0_i32 : i32 to vector<16x1xi32>
    %21 = arith.cmpi eq, %7, %20 : vector<16x1xi32>
    %c8_i32 = arith.constant 8 : i32
    %22 = vector.broadcast %c8_i32 : i32 to vector<16x1xi32>
    %23 = arith.cmpi eq, %7, %22 : vector<16x1xi32>
    %24 = arith.ori %21, %23 : vector<16x1xi1>
    %cst_5 = arith.constant 0.000000e+00 : f32
    %25 = vector.broadcast %cst_5 : f32 to vector<16x1xf32>
    %26 = arith.select %24, %19, %25 : vector<16x1xi1>, vector<16x1xf32>
    %27 = arith.addf %8, %26 : vector<16x1xf32>
    %cst_6 = arith.constant -0.532021105 : f32
    %28 = vector.broadcast %cst_6 : f32 to vector<16x1xf32>
    %29 = arith.mulf %28, %1 : vector<16x1xf32>
    %cst_7 = arith.constant 0.359575868 : f32
    %30 = vector.broadcast %cst_7 : f32 to vector<16x1xf32>
    %31 = arith.mulf %30, %2 : vector<16x1xf32>
    %32 = arith.addf %29, %31 : vector<16x1xf32>
    %cst_8 = arith.constant 0.442070156 : f32
    %33 = vector.broadcast %cst_8 : f32 to vector<16x1xf32>
    %34 = arith.mulf %33, %3 : vector<16x1xf32>
    %35 = arith.addf %32, %34 : vector<16x1xf32>
    %cst_9 = arith.constant -0.626284838 : f32
    %36 = vector.broadcast %cst_9 : f32 to vector<16x1xf32>
    %37 = arith.mulf %36, %4 : vector<16x1xf32>
    %38 = arith.addf %35, %37 : vector<16x1xf32>
    %39 = arith.maximumf %19, %38 : vector<16x1xf32>
    %c1_i32 = arith.constant 1 : i32
    %40 = vector.broadcast %c1_i32 : i32 to vector<16x1xi32>
    %41 = arith.cmpi eq, %7, %40 : vector<16x1xi32>
    %c9_i32 = arith.constant 9 : i32
    %42 = vector.broadcast %c9_i32 : i32 to vector<16x1xi32>
    %43 = arith.cmpi eq, %7, %42 : vector<16x1xi32>
    %44 = arith.ori %41, %43 : vector<16x1xi1>
    %cst_10 = arith.constant 0.000000e+00 : f32
    %45 = vector.broadcast %cst_10 : f32 to vector<16x1xf32>
    %46 = arith.select %44, %38, %45 : vector<16x1xi1>, vector<16x1xf32>
    %47 = arith.addf %27, %46 : vector<16x1xf32>
    %cst_11 = arith.constant 0.586880863 : f32
    %48 = vector.broadcast %cst_11 : f32 to vector<16x1xf32>
    %49 = arith.mulf %48, %1 : vector<16x1xf32>
    %cst_12 = arith.constant -0.667903066 : f32
    %50 = vector.broadcast %cst_12 : f32 to vector<16x1xf32>
    %51 = arith.mulf %50, %2 : vector<16x1xf32>
    %52 = arith.addf %49, %51 : vector<16x1xf32>
    %cst_13 = arith.constant -0.455246687 : f32
    %53 = vector.broadcast %cst_13 : f32 to vector<16x1xf32>
    %54 = arith.mulf %53, %3 : vector<16x1xf32>
    %55 = arith.addf %52, %54 : vector<16x1xf32>
    %cst_14 = arith.constant 0.0471894667 : f32
    %56 = vector.broadcast %cst_14 : f32 to vector<16x1xf32>
    %57 = arith.mulf %56, %4 : vector<16x1xf32>
    %58 = arith.addf %55, %57 : vector<16x1xf32>
    %59 = arith.maximumf %39, %58 : vector<16x1xf32>
    %c2_i32 = arith.constant 2 : i32
    %60 = vector.broadcast %c2_i32 : i32 to vector<16x1xi32>
    %61 = arith.cmpi eq, %7, %60 : vector<16x1xi32>
    %c10_i32 = arith.constant 10 : i32
    %62 = vector.broadcast %c10_i32 : i32 to vector<16x1xi32>
    %63 = arith.cmpi eq, %7, %62 : vector<16x1xi32>
    %64 = arith.ori %61, %63 : vector<16x1xi1>
    %cst_15 = arith.constant 0.000000e+00 : f32
    %65 = vector.broadcast %cst_15 : f32 to vector<16x1xf32>
    %66 = arith.select %64, %58, %65 : vector<16x1xi1>, vector<16x1xf32>
    %67 = arith.addf %47, %66 : vector<16x1xf32>
    %cst_16 = arith.constant -0.532642245 : f32
    %68 = vector.broadcast %cst_16 : f32 to vector<16x1xf32>
    %69 = arith.mulf %68, %1 : vector<16x1xf32>
    %cst_17 = arith.constant 0.110542037 : f32
    %70 = vector.broadcast %cst_17 : f32 to vector<16x1xf32>
    %71 = arith.mulf %70, %2 : vector<16x1xf32>
    %72 = arith.addf %69, %71 : vector<16x1xf32>
    %cst_18 = arith.constant 0.806007325 : f32
    %73 = vector.broadcast %cst_18 : f32 to vector<16x1xf32>
    %74 = arith.mulf %73, %3 : vector<16x1xf32>
    %75 = arith.addf %72, %74 : vector<16x1xf32>
    %cst_19 = arith.constant 0.233291626 : f32
    %76 = vector.broadcast %cst_19 : f32 to vector<16x1xf32>
    %77 = arith.mulf %76, %4 : vector<16x1xf32>
    %78 = arith.addf %75, %77 : vector<16x1xf32>
    %79 = arith.maximumf %59, %78 : vector<16x1xf32>
    %c3_i32 = arith.constant 3 : i32
    %80 = vector.broadcast %c3_i32 : i32 to vector<16x1xi32>
    %81 = arith.cmpi eq, %7, %80 : vector<16x1xi32>
    %c11_i32 = arith.constant 11 : i32
    %82 = vector.broadcast %c11_i32 : i32 to vector<16x1xi32>
    %83 = arith.cmpi eq, %7, %82 : vector<16x1xi32>
    %84 = arith.ori %81, %83 : vector<16x1xi1>
    %cst_20 = arith.constant 0.000000e+00 : f32
    %85 = vector.broadcast %cst_20 : f32 to vector<16x1xf32>
    %86 = arith.select %84, %78, %85 : vector<16x1xi1>, vector<16x1xf32>
    %87 = arith.addf %67, %86 : vector<16x1xf32>
    %cst_21 = arith.constant 0.478494942 : f32
    %88 = vector.broadcast %cst_21 : f32 to vector<16x1xf32>
    %89 = arith.mulf %88, %1 : vector<16x1xf32>
    %cst_22 = arith.constant -0.380219281 : f32
    %90 = vector.broadcast %cst_22 : f32 to vector<16x1xf32>
    %91 = arith.mulf %90, %2 : vector<16x1xf32>
    %92 = arith.addf %89, %91 : vector<16x1xf32>
    %cst_23 = arith.constant 0.736283838 : f32
    %93 = vector.broadcast %cst_23 : f32 to vector<16x1xf32>
    %94 = arith.mulf %93, %3 : vector<16x1xf32>
    %95 = arith.addf %92, %94 : vector<16x1xf32>
    %cst_24 = arith.constant 0.290451437 : f32
    %96 = vector.broadcast %cst_24 : f32 to vector<16x1xf32>
    %97 = arith.mulf %96, %4 : vector<16x1xf32>
    %98 = arith.addf %95, %97 : vector<16x1xf32>
    %99 = arith.maximumf %79, %98 : vector<16x1xf32>
    %c4_i32 = arith.constant 4 : i32
    %100 = vector.broadcast %c4_i32 : i32 to vector<16x1xi32>
    %101 = arith.cmpi eq, %7, %100 : vector<16x1xi32>
    %c12_i32 = arith.constant 12 : i32
    %102 = vector.broadcast %c12_i32 : i32 to vector<16x1xi32>
    %103 = arith.cmpi eq, %7, %102 : vector<16x1xi32>
    %104 = arith.ori %101, %103 : vector<16x1xi1>
    %cst_25 = arith.constant 0.000000e+00 : f32
    %105 = vector.broadcast %cst_25 : f32 to vector<16x1xf32>
    %106 = arith.select %104, %98, %105 : vector<16x1xi1>, vector<16x1xf32>
    %107 = arith.addf %87, %106 : vector<16x1xf32>
    %cst_26 = arith.constant -0.374679625 : f32
    %108 = vector.broadcast %cst_26 : f32 to vector<16x1xf32>
    %109 = arith.mulf %108, %1 : vector<16x1xf32>
    %cst_27 = arith.constant -0.514307141 : f32
    %110 = vector.broadcast %cst_27 : f32 to vector<16x1xf32>
    %111 = arith.mulf %110, %2 : vector<16x1xf32>
    %112 = arith.addf %109, %111 : vector<16x1xf32>
    %cst_28 = arith.constant 0.448073924 : f32
    %113 = vector.broadcast %cst_28 : f32 to vector<16x1xf32>
    %114 = arith.mulf %113, %3 : vector<16x1xf32>
    %115 = arith.addf %112, %114 : vector<16x1xf32>
    %cst_29 = arith.constant 0.627959549 : f32
    %116 = vector.broadcast %cst_29 : f32 to vector<16x1xf32>
    %117 = arith.mulf %116, %4 : vector<16x1xf32>
    %118 = arith.addf %115, %117 : vector<16x1xf32>
    %119 = arith.maximumf %99, %118 : vector<16x1xf32>
    %c5_i32 = arith.constant 5 : i32
    %120 = vector.broadcast %c5_i32 : i32 to vector<16x1xi32>
    %121 = arith.cmpi eq, %7, %120 : vector<16x1xi32>
    %c13_i32 = arith.constant 13 : i32
    %122 = vector.broadcast %c13_i32 : i32 to vector<16x1xi32>
    %123 = arith.cmpi eq, %7, %122 : vector<16x1xi32>
    %124 = arith.ori %121, %123 : vector<16x1xi1>
    %cst_30 = arith.constant 0.000000e+00 : f32
    %125 = vector.broadcast %cst_30 : f32 to vector<16x1xf32>
    %126 = arith.select %124, %118, %125 : vector<16x1xi1>, vector<16x1xf32>
    %127 = arith.addf %107, %126 : vector<16x1xf32>
    %cst_31 = arith.constant 0.425180227 : f32
    %128 = vector.broadcast %cst_31 : f32 to vector<16x1xf32>
    %129 = arith.mulf %128, %1 : vector<16x1xf32>
    %cst_32 = arith.constant -0.230443418 : f32
    %130 = vector.broadcast %cst_32 : f32 to vector<16x1xf32>
    %131 = arith.mulf %130, %2 : vector<16x1xf32>
    %132 = arith.addf %129, %131 : vector<16x1xf32>
    %cst_33 = arith.constant 0.415882111 : f32
    %133 = vector.broadcast %cst_33 : f32 to vector<16x1xf32>
    %134 = arith.mulf %133, %3 : vector<16x1xf32>
    %135 = arith.addf %132, %134 : vector<16x1xf32>
    %cst_34 = arith.constant 0.770168543 : f32
    %136 = vector.broadcast %cst_34 : f32 to vector<16x1xf32>
    %137 = arith.mulf %136, %4 : vector<16x1xf32>
    %138 = arith.addf %135, %137 : vector<16x1xf32>
    %139 = arith.maximumf %119, %138 : vector<16x1xf32>
    %c6_i32 = arith.constant 6 : i32
    %140 = vector.broadcast %c6_i32 : i32 to vector<16x1xi32>
    %141 = arith.cmpi eq, %7, %140 : vector<16x1xi32>
    %c14_i32 = arith.constant 14 : i32
    %142 = vector.broadcast %c14_i32 : i32 to vector<16x1xi32>
    %143 = arith.cmpi eq, %7, %142 : vector<16x1xi32>
    %144 = arith.ori %141, %143 : vector<16x1xi1>
    %cst_35 = arith.constant 0.000000e+00 : f32
    %145 = vector.broadcast %cst_35 : f32 to vector<16x1xf32>
    %146 = arith.select %144, %138, %145 : vector<16x1xi1>, vector<16x1xf32>
    %147 = arith.addf %127, %146 : vector<16x1xf32>
    %cst_36 = arith.constant -0.751636863 : f32
    %148 = vector.broadcast %cst_36 : f32 to vector<16x1xf32>
    %149 = arith.mulf %148, %1 : vector<16x1xf32>
    %cst_37 = arith.constant 0.131985843 : f32
    %150 = vector.broadcast %cst_37 : f32 to vector<16x1xf32>
    %151 = arith.mulf %150, %2 : vector<16x1xf32>
    %152 = arith.addf %149, %151 : vector<16x1xf32>
    %cst_38 = arith.constant 0.542938054 : f32
    %153 = vector.broadcast %cst_38 : f32 to vector<16x1xf32>
    %154 = arith.mulf %153, %3 : vector<16x1xf32>
    %155 = arith.addf %152, %154 : vector<16x1xf32>
    %cst_39 = arith.constant -0.350485474 : f32
    %156 = vector.broadcast %cst_39 : f32 to vector<16x1xf32>
    %157 = arith.mulf %156, %4 : vector<16x1xf32>
    %158 = arith.addf %155, %157 : vector<16x1xf32>
    %159 = arith.maximumf %139, %158 : vector<16x1xf32>
    %c7_i32 = arith.constant 7 : i32
    %160 = vector.broadcast %c7_i32 : i32 to vector<16x1xi32>
    %161 = arith.cmpi eq, %7, %160 : vector<16x1xi32>
    %c15_i32 = arith.constant 15 : i32
    %162 = vector.broadcast %c15_i32 : i32 to vector<16x1xi32>
    %163 = arith.cmpi eq, %7, %162 : vector<16x1xi32>
    %164 = arith.ori %161, %163 : vector<16x1xi1>
    %cst_40 = arith.constant 0.000000e+00 : f32
    %165 = vector.broadcast %cst_40 : f32 to vector<16x1xf32>
    %166 = arith.select %164, %158, %165 : vector<16x1xi1>, vector<16x1xf32>
    %167 = arith.addf %147, %166 : vector<16x1xf32>
    %168 = arith.subf %159, %167 : vector<16x1xf32>
    %cst_41 = arith.constant 1.000000e-03 : f32
    %169 = vector.broadcast %cst_41 : f32 to vector<16x1xf32>
    %170 = arith.cmpf ogt, %168, %169 : vector<16x1xf32>
    %cst_42 = arith.constant 0.000000e+00 : f32
    %171 = vector.broadcast %cst_42 : f32 to vector<16x1xf32>
    %172 = arith.select %170, %168, %171 : vector<16x1xi1>, vector<16x1xf32>
    %173 = vector.shape_cast %172 : vector<16x1xf32> to vector<1x16x1xf32>
    %cst_43 = arith.constant dense<0.000000e+00> : vector<1xf32>
    %174 = vector.multi_reduction <add>, %173, %cst_43 [1, 2] : vector<1x16x1xf32> to vector<1xf32>
    %175 = vector.shape_cast %174 : vector<1xf32> to vector<1x1x1xf32>
    %176 = vector.extract %175[0, 0, 0] : f32 from vector<1x1x1xf32>
    %177 = vector.broadcast %176 : f32 to vector<1x1xf32>
    %cst_44 = arith.constant 6.250000e-02 : f32
    %178 = vector.broadcast %cst_44 : f32 to vector<1x1xf32>
    %179 = arith.mulf %177, %178 : vector<1x1xf32>
    %180 = arith.mulf %3, %3 : vector<16x1xf32>
    %181 = arith.mulf %4, %4 : vector<16x1xf32>
    %182 = arith.addf %180, %181 : vector<16x1xf32>
    %cst_45 = arith.constant 2.000000e+00 : f32
    %183 = vector.broadcast %cst_45 : f32 to vector<16x1xf32>
    %184 = arith.mulf %183, %182 : vector<16x1xf32>
    %cst_46 = arith.constant 1.000000e+00 : f32
    %185 = vector.broadcast %cst_46 : f32 to vector<16x1xf32>
    %186 = arith.subf %185, %184 : vector<16x1xf32>
    %cst_47 = arith.constant 2.000000e+00 : f32
    %187 = vector.broadcast %cst_47 : f32 to vector<16x1xf32>
    %188 = arith.mulf %187, %2 : vector<16x1xf32>
    %189 = arith.mulf %188, %3 : vector<16x1xf32>
    %cst_48 = arith.constant 2.000000e+00 : f32
    %190 = vector.broadcast %cst_48 : f32 to vector<16x1xf32>
    %191 = arith.mulf %190, %1 : vector<16x1xf32>
    %192 = arith.mulf %191, %4 : vector<16x1xf32>
    %193 = arith.subf %189, %192 : vector<16x1xf32>
    %cst_49 = arith.constant 2.000000e+00 : f32
    %194 = vector.broadcast %cst_49 : f32 to vector<16x1xf32>
    %195 = arith.mulf %194, %1 : vector<16x1xf32>
    %196 = arith.mulf %195, %3 : vector<16x1xf32>
    %cst_50 = arith.constant 2.000000e+00 : f32
    %197 = vector.broadcast %cst_50 : f32 to vector<16x1xf32>
    %198 = arith.mulf %197, %2 : vector<16x1xf32>
    %199 = arith.mulf %198, %4 : vector<16x1xf32>
    %200 = arith.addf %196, %199 : vector<16x1xf32>
    %cst_51 = arith.constant 2.000000e+00 : f32
    %201 = vector.broadcast %cst_51 : f32 to vector<16x1xf32>
    %202 = arith.mulf %201, %2 : vector<16x1xf32>
    %203 = arith.mulf %202, %3 : vector<16x1xf32>
    %cst_52 = arith.constant 2.000000e+00 : f32
    %204 = vector.broadcast %cst_52 : f32 to vector<16x1xf32>
    %205 = arith.mulf %204, %4 : vector<16x1xf32>
    %206 = arith.mulf %205, %1 : vector<16x1xf32>
    %207 = arith.addf %203, %206 : vector<16x1xf32>
    %208 = arith.mulf %2, %2 : vector<16x1xf32>
    %209 = arith.mulf %4, %4 : vector<16x1xf32>
    %210 = arith.addf %208, %209 : vector<16x1xf32>
    %cst_53 = arith.constant 2.000000e+00 : f32
    %211 = vector.broadcast %cst_53 : f32 to vector<16x1xf32>
    %212 = arith.mulf %211, %210 : vector<16x1xf32>
    %cst_54 = arith.constant 1.000000e+00 : f32
    %213 = vector.broadcast %cst_54 : f32 to vector<16x1xf32>
    %214 = arith.subf %213, %212 : vector<16x1xf32>
    %cst_55 = arith.constant -2.000000e+00 : f32
    %215 = vector.broadcast %cst_55 : f32 to vector<16x1xf32>
    %216 = arith.mulf %215, %1 : vector<16x1xf32>
    %217 = arith.mulf %216, %2 : vector<16x1xf32>
    %cst_56 = arith.constant 2.000000e+00 : f32
    %218 = vector.broadcast %cst_56 : f32 to vector<16x1xf32>
    %219 = arith.mulf %218, %3 : vector<16x1xf32>
    %220 = arith.mulf %219, %4 : vector<16x1xf32>
    %221 = arith.addf %217, %220 : vector<16x1xf32>
    %cst_57 = arith.constant -2.000000e+00 : f32
    %222 = vector.broadcast %cst_57 : f32 to vector<16x1xf32>
    %223 = arith.mulf %222, %1 : vector<16x1xf32>
    %224 = arith.mulf %223, %3 : vector<16x1xf32>
    %cst_58 = arith.constant 2.000000e+00 : f32
    %225 = vector.broadcast %cst_58 : f32 to vector<16x1xf32>
    %226 = arith.mulf %225, %2 : vector<16x1xf32>
    %227 = arith.mulf %226, %4 : vector<16x1xf32>
    %228 = arith.addf %224, %227 : vector<16x1xf32>
    %cst_59 = arith.constant 2.000000e+00 : f32
    %229 = vector.broadcast %cst_59 : f32 to vector<16x1xf32>
    %230 = arith.mulf %229, %1 : vector<16x1xf32>
    %231 = arith.mulf %230, %2 : vector<16x1xf32>
    %cst_60 = arith.constant 2.000000e+00 : f32
    %232 = vector.broadcast %cst_60 : f32 to vector<16x1xf32>
    %233 = arith.mulf %232, %3 : vector<16x1xf32>
    %234 = arith.mulf %233, %4 : vector<16x1xf32>
    %235 = arith.addf %231, %234 : vector<16x1xf32>
    %236 = arith.mulf %2, %2 : vector<16x1xf32>
    %237 = arith.mulf %3, %3 : vector<16x1xf32>
    %238 = arith.addf %236, %237 : vector<16x1xf32>
    %cst_61 = arith.constant 2.000000e+00 : f32
    %239 = vector.broadcast %cst_61 : f32 to vector<16x1xf32>
    %240 = arith.mulf %239, %238 : vector<16x1xf32>
    %cst_62 = arith.constant 1.000000e+00 : f32
    %241 = vector.broadcast %cst_62 : f32 to vector<16x1xf32>
    %242 = arith.subf %241, %240 : vector<16x1xf32>
    %c0_63 = arith.constant 0 : index
    %c0_64 = arith.constant 0 : index
    %c0_65 = arith.constant 0 : index
    %243 = vector.load %arg1[%c0_63, %c0_64, %c0_65] : memref<6x16x128xf32, #tpu.memory_space<vmem>>, vector<1x16x128xf32>
    %244 = vector.shape_cast %243 : vector<1x16x128xf32> to vector<16x128xf32>
    %c1 = arith.constant 1 : index
    %c0_66 = arith.constant 0 : index
    %c0_67 = arith.constant 0 : index
    %245 = vector.load %arg1[%c1, %c0_66, %c0_67] : memref<6x16x128xf32, #tpu.memory_space<vmem>>, vector<1x16x128xf32>
    %246 = vector.shape_cast %245 : vector<1x16x128xf32> to vector<16x128xf32>
    %c2 = arith.constant 2 : index
    %c0_68 = arith.constant 0 : index
    %c0_69 = arith.constant 0 : index
    %247 = vector.load %arg1[%c2, %c0_68, %c0_69] : memref<6x16x128xf32, #tpu.memory_space<vmem>>, vector<1x16x128xf32>
    %248 = vector.shape_cast %247 : vector<1x16x128xf32> to vector<16x128xf32>
    %c3 = arith.constant 3 : index
    %c0_70 = arith.constant 0 : index
    %c0_71 = arith.constant 0 : index
    %249 = vector.load %arg1[%c3, %c0_70, %c0_71] : memref<6x16x128xf32, #tpu.memory_space<vmem>>, vector<1x16x128xf32>
    %250 = vector.shape_cast %249 : vector<1x16x128xf32> to vector<16x128xf32>
    %c4 = arith.constant 4 : index
    %c0_72 = arith.constant 0 : index
    %c0_73 = arith.constant 0 : index
    %251 = vector.load %arg1[%c4, %c0_72, %c0_73] : memref<6x16x128xf32, #tpu.memory_space<vmem>>, vector<1x16x128xf32>
    %252 = vector.shape_cast %251 : vector<1x16x128xf32> to vector<16x128xf32>
    %c5 = arith.constant 5 : index
    %c0_74 = arith.constant 0 : index
    %c0_75 = arith.constant 0 : index
    %253 = vector.load %arg1[%c5, %c0_74, %c0_75] : memref<6x16x128xf32, #tpu.memory_space<vmem>>, vector<1x16x128xf32>
    %254 = vector.shape_cast %253 : vector<1x16x128xf32> to vector<16x128xf32>
    %255 = vector.broadcast %186 : vector<16x1xf32> to vector<16x128xf32>
    %256 = arith.mulf %255, %244 : vector<16x128xf32>
    %257 = vector.broadcast %193 : vector<16x1xf32> to vector<16x128xf32>
    %258 = arith.mulf %257, %246 : vector<16x128xf32>
    %259 = arith.addf %256, %258 : vector<16x128xf32>
    %260 = vector.broadcast %200 : vector<16x1xf32> to vector<16x128xf32>
    %261 = arith.mulf %260, %248 : vector<16x128xf32>
    %262 = arith.addf %259, %261 : vector<16x128xf32>
    %263 = vector.broadcast %207 : vector<16x1xf32> to vector<16x128xf32>
    %264 = arith.mulf %263, %244 : vector<16x128xf32>
    %265 = vector.broadcast %214 : vector<16x1xf32> to vector<16x128xf32>
    %266 = arith.mulf %265, %246 : vector<16x128xf32>
    %267 = arith.addf %264, %266 : vector<16x128xf32>
    %268 = vector.broadcast %221 : vector<16x1xf32> to vector<16x128xf32>
    %269 = arith.mulf %268, %248 : vector<16x128xf32>
    %270 = arith.addf %267, %269 : vector<16x128xf32>
    %271 = vector.broadcast %228 : vector<16x1xf32> to vector<16x128xf32>
    %272 = arith.mulf %271, %244 : vector<16x128xf32>
    %273 = vector.broadcast %235 : vector<16x1xf32> to vector<16x128xf32>
    %274 = arith.mulf %273, %246 : vector<16x128xf32>
    %275 = arith.addf %272, %274 : vector<16x128xf32>
    %276 = vector.broadcast %242 : vector<16x1xf32> to vector<16x128xf32>
    %277 = arith.mulf %276, %248 : vector<16x128xf32>
    %278 = arith.addf %275, %277 : vector<16x128xf32>
    %279 = arith.subf %262, %250 : vector<16x128xf32>
    %280 = arith.subf %270, %252 : vector<16x128xf32>
    %281 = arith.subf %278, %254 : vector<16x128xf32>
    %282 = arith.mulf %279, %279 : vector<16x128xf32>
    %283 = arith.mulf %280, %280 : vector<16x128xf32>
    %284 = arith.addf %282, %283 : vector<16x128xf32>
    %285 = arith.mulf %281, %281 : vector<16x128xf32>
    %286 = arith.addf %284, %285 : vector<16x128xf32>
    %287 = math.sqrt %286 : vector<16x128xf32>
    %cst_76 = arith.constant dense<0.000000e+00> : vector<16xf32>
    %288 = vector.multi_reduction <add>, %287, %cst_76 [1] : vector<16x128xf32> to vector<16xf32>
    %289 = vector.shape_cast %288 : vector<16xf32> to vector<16x1xf32>
    %cst_77 = arith.constant 1.280000e+02 : f32
    %290 = vector.broadcast %cst_77 : f32 to vector<16x1xf32>
    %291 = arith.divf %289, %290 : vector<16x1xf32>
    %292 = arith.mulf %6, %5 : vector<16x1xf32>
    %293 = arith.divf %291, %292 : vector<16x1xf32>
    %294 = math.log %5 : vector<16x1xf32>
    %295 = arith.addf %293, %294 : vector<16x1xf32>
    %296 = vector.shape_cast %295 : vector<16x1xf32> to vector<1x16x1xf32>
    %cst_78 = arith.constant dense<0.000000e+00> : vector<1xf32>
    %297 = vector.multi_reduction <add>, %296, %cst_78 [1, 2] : vector<1x16x1xf32> to vector<1xf32>
    %298 = vector.shape_cast %297 : vector<1xf32> to vector<1x1x1xf32>
    %299 = vector.extract %298[0, 0, 0] : f32 from vector<1x1x1xf32>
    %300 = vector.broadcast %299 : f32 to vector<1x1xf32>
    %cst_79 = arith.constant 1.250000e-01 : f32
    %301 = vector.broadcast %cst_79 : f32 to vector<1x1xf32>
    %302 = arith.mulf %300, %301 : vector<1x1xf32>
    %303 = tpu.iota {dimensions = array<i32: 1>} : vector<64x256xi32>
    %304 = arith.sitofp %303 : vector<64x256xi32> to vector<64x256xf32>
    %cst_80 = arith.constant 0.000000e+00 : f32
    %305 = vector.broadcast %cst_80 : f32 to vector<1x1xf32>
    %c0_81 = arith.constant 0 : index
    %c3_82 = arith.constant 3 : index
    %306 = vector.load %arg2[%c0_81, %c3_82] : memref<128x4xf32, #tpu.memory_space<vmem>>, vector<64x1xf32>
    %307 = vector.broadcast %306 : vector<64x1xf32> to vector<64x256xf32>
    %308 = arith.cmpf oeq, %304, %307 : vector<64x256xf32>
    %309 = arith.extui %308 : vector<64x256xi1> to vector<64x256xi32>
    %310 = arith.sitofp %309 : vector<64x256xi32> to vector<64x256xf32>
    %c0_83 = arith.constant 0 : index
    %c0_84 = arith.constant 0 : index
    %311 = vector.load %arg3[%c0_83, %c0_84] : memref<6x256xf32, #tpu.memory_space<vmem>>, vector<1x256xf32>
    %312 = vector.broadcast %311 : vector<1x256xf32> to vector<64x256xf32>
    %313 = arith.mulf %310, %312 : vector<64x256xf32>
    %cst_85 = arith.constant dense<0.000000e+00> : vector<64xf32>
    %314 = vector.multi_reduction <add>, %313, %cst_85 [1] : vector<64x256xf32> to vector<64xf32>
    %315 = vector.shape_cast %314 : vector<64xf32> to vector<64x1xf32>
    %c0_86 = arith.constant 0 : index
    %c0_87 = arith.constant 0 : index
    %316 = vector.load %arg2[%c0_86, %c0_87] : memref<128x4xf32, #tpu.memory_space<vmem>>, vector<64x1xf32>
    %317 = arith.subf %316, %315 : vector<64x1xf32>
    %318 = math.absf %317 : vector<64x1xf32>
    %cst_88 = arith.constant 1.000000e+00 : f32
    %319 = vector.broadcast %cst_88 : f32 to vector<64x1xf32>
    %320 = arith.cmpf olt, %318, %319 : vector<64x1xf32>
    %cst_89 = arith.constant 5.000000e-01 : f32
    %321 = vector.broadcast %cst_89 : f32 to vector<64x1xf32>
    %322 = arith.mulf %321, %317 : vector<64x1xf32>
    %323 = arith.mulf %322, %317 : vector<64x1xf32>
    %cst_90 = arith.constant 5.000000e-01 : f32
    %324 = vector.broadcast %cst_90 : f32 to vector<64x1xf32>
    %325 = arith.subf %318, %324 : vector<64x1xf32>
    %326 = arith.select %320, %323, %325 : vector<64x1xi1>, vector<64x1xf32>
    %327 = vector.shape_cast %326 : vector<64x1xf32> to vector<1x64x1xf32>
    %cst_91 = arith.constant dense<0.000000e+00> : vector<1xf32>
    %328 = vector.multi_reduction <add>, %327, %cst_91 [1, 2] : vector<1x64x1xf32> to vector<1xf32>
    %329 = vector.shape_cast %328 : vector<1xf32> to vector<1x1x1xf32>
    %330 = vector.extract %329[0, 0, 0] : f32 from vector<1x1x1xf32>
    %331 = vector.broadcast %330 : f32 to vector<1x1xf32>
    %332 = arith.addf %305, %331 : vector<1x1xf32>
    %c1_92 = arith.constant 1 : index
    %c0_93 = arith.constant 0 : index
    %333 = vector.load %arg3[%c1_92, %c0_93] : memref<6x256xf32, #tpu.memory_space<vmem>>, vector<1x256xf32>
    %334 = vector.broadcast %333 : vector<1x256xf32> to vector<64x256xf32>
    %335 = arith.mulf %310, %334 : vector<64x256xf32>
    %cst_94 = arith.constant dense<0.000000e+00> : vector<64xf32>
    %336 = vector.multi_reduction <add>, %335, %cst_94 [1] : vector<64x256xf32> to vector<64xf32>
    %337 = vector.shape_cast %336 : vector<64xf32> to vector<64x1xf32>
    %c0_95 = arith.constant 0 : index
    %c1_96 = arith.constant 1 : index
    %338 = vector.load %arg2[%c0_95, %c1_96] : memref<128x4xf32, #tpu.memory_space<vmem>>, vector<64x1xf32>
    %339 = arith.subf %338, %337 : vector<64x1xf32>
    %340 = math.absf %339 : vector<64x1xf32>
    %cst_97 = arith.constant 1.000000e+00 : f32
    %341 = vector.broadcast %cst_97 : f32 to vector<64x1xf32>
    %342 = arith.cmpf olt, %340, %341 : vector<64x1xf32>
    %cst_98 = arith.constant 5.000000e-01 : f32
    %343 = vector.broadcast %cst_98 : f32 to vector<64x1xf32>
    %344 = arith.mulf %343, %339 : vector<64x1xf32>
    %345 = arith.mulf %344, %339 : vector<64x1xf32>
    %cst_99 = arith.constant 5.000000e-01 : f32
    %346 = vector.broadcast %cst_99 : f32 to vector<64x1xf32>
    %347 = arith.subf %340, %346 : vector<64x1xf32>
    %348 = arith.select %342, %345, %347 : vector<64x1xi1>, vector<64x1xf32>
    %349 = vector.shape_cast %348 : vector<64x1xf32> to vector<1x64x1xf32>
    %cst_100 = arith.constant dense<0.000000e+00> : vector<1xf32>
    %350 = vector.multi_reduction <add>, %349, %cst_100 [1, 2] : vector<1x64x1xf32> to vector<1xf32>
    %351 = vector.shape_cast %350 : vector<1xf32> to vector<1x1x1xf32>
    %352 = vector.extract %351[0, 0, 0] : f32 from vector<1x1x1xf32>
    %353 = vector.broadcast %352 : f32 to vector<1x1xf32>
    %354 = arith.addf %332, %353 : vector<1x1xf32>
    %c2_101 = arith.constant 2 : index
    %c0_102 = arith.constant 0 : index
    %355 = vector.load %arg3[%c2_101, %c0_102] : memref<6x256xf32, #tpu.memory_space<vmem>>, vector<1x256xf32>
    %356 = vector.broadcast %355 : vector<1x256xf32> to vector<64x256xf32>
    %357 = arith.mulf %310, %356 : vector<64x256xf32>
    %cst_103 = arith.constant dense<0.000000e+00> : vector<64xf32>
    %358 = vector.multi_reduction <add>, %357, %cst_103 [1] : vector<64x256xf32> to vector<64xf32>
    %359 = vector.shape_cast %358 : vector<64xf32> to vector<64x1xf32>
    %c0_104 = arith.constant 0 : index
    %c2_105 = arith.constant 2 : index
    %360 = vector.load %arg2[%c0_104, %c2_105] : memref<128x4xf32, #tpu.memory_space<vmem>>, vector<64x1xf32>
    %361 = arith.subf %360, %359 : vector<64x1xf32>
    %362 = math.absf %361 : vector<64x1xf32>
    %cst_106 = arith.constant 1.000000e+00 : f32
    %363 = vector.broadcast %cst_106 : f32 to vector<64x1xf32>
    %364 = arith.cmpf olt, %362, %363 : vector<64x1xf32>
    %cst_107 = arith.constant 5.000000e-01 : f32
    %365 = vector.broadcast %cst_107 : f32 to vector<64x1xf32>
    %366 = arith.mulf %365, %361 : vector<64x1xf32>
    %367 = arith.mulf %366, %361 : vector<64x1xf32>
    %cst_108 = arith.constant 5.000000e-01 : f32
    %368 = vector.broadcast %cst_108 : f32 to vector<64x1xf32>
    %369 = arith.subf %362, %368 : vector<64x1xf32>
    %370 = arith.select %364, %367, %369 : vector<64x1xi1>, vector<64x1xf32>
    %371 = vector.shape_cast %370 : vector<64x1xf32> to vector<1x64x1xf32>
    %cst_109 = arith.constant dense<0.000000e+00> : vector<1xf32>
    %372 = vector.multi_reduction <add>, %371, %cst_109 [1, 2] : vector<1x64x1xf32> to vector<1xf32>
    %373 = vector.shape_cast %372 : vector<1xf32> to vector<1x1x1xf32>
    %374 = vector.extract %373[0, 0, 0] : f32 from vector<1x1x1xf32>
    %375 = vector.broadcast %374 : f32 to vector<1x1xf32>
    %376 = arith.addf %354, %375 : vector<1x1xf32>
    %c64 = arith.constant 64 : index
    %c3_110 = arith.constant 3 : index
    %377 = vector.load %arg2[%c64, %c3_110] : memref<128x4xf32, #tpu.memory_space<vmem>>, vector<64x1xf32>
    %378 = vector.broadcast %377 : vector<64x1xf32> to vector<64x256xf32>
    %379 = arith.cmpf oeq, %304, %378 : vector<64x256xf32>
    %380 = arith.extui %379 : vector<64x256xi1> to vector<64x256xi32>
    %381 = arith.sitofp %380 : vector<64x256xi32> to vector<64x256xf32>
    %c3_111 = arith.constant 3 : index
    %c0_112 = arith.constant 0 : index
    %382 = vector.load %arg3[%c3_111, %c0_112] : memref<6x256xf32, #tpu.memory_space<vmem>>, vector<1x256xf32>
    %383 = vector.broadcast %382 : vector<1x256xf32> to vector<64x256xf32>
    %384 = arith.mulf %381, %383 : vector<64x256xf32>
    %cst_113 = arith.constant dense<0.000000e+00> : vector<64xf32>
    %385 = vector.multi_reduction <add>, %384, %cst_113 [1] : vector<64x256xf32> to vector<64xf32>
    %386 = vector.shape_cast %385 : vector<64xf32> to vector<64x1xf32>
    %c64_114 = arith.constant 64 : index
    %c0_115 = arith.constant 0 : index
    %387 = vector.load %arg2[%c64_114, %c0_115] : memref<128x4xf32, #tpu.memory_space<vmem>>, vector<64x1xf32>
    %388 = arith.subf %387, %386 : vector<64x1xf32>
    %389 = math.absf %388 : vector<64x1xf32>
    %cst_116 = arith.constant 1.000000e+00 : f32
    %390 = vector.broadcast %cst_116 : f32 to vector<64x1xf32>
    %391 = arith.cmpf olt, %389, %390 : vector<64x1xf32>
    %cst_117 = arith.constant 5.000000e-01 : f32
    %392 = vector.broadcast %cst_117 : f32 to vector<64x1xf32>
    %393 = arith.mulf %392, %388 : vector<64x1xf32>
    %394 = arith.mulf %393, %388 : vector<64x1xf32>
    %cst_118 = arith.constant 5.000000e-01 : f32
    %395 = vector.broadcast %cst_118 : f32 to vector<64x1xf32>
    %396 = arith.subf %389, %395 : vector<64x1xf32>
    %397 = arith.select %391, %394, %396 : vector<64x1xi1>, vector<64x1xf32>
    %398 = vector.shape_cast %397 : vector<64x1xf32> to vector<1x64x1xf32>
    %cst_119 = arith.constant dense<0.000000e+00> : vector<1xf32>
    %399 = vector.multi_reduction <add>, %398, %cst_119 [1, 2] : vector<1x64x1xf32> to vector<1xf32>
    %400 = vector.shape_cast %399 : vector<1xf32> to vector<1x1x1xf32>
    %401 = vector.extract %400[0, 0, 0] : f32 from vector<1x1x1xf32>
    %402 = vector.broadcast %401 : f32 to vector<1x1xf32>
    %403 = arith.addf %376, %402 : vector<1x1xf32>
    %c4_120 = arith.constant 4 : index
    %c0_121 = arith.constant 0 : index
    %404 = vector.load %arg3[%c4_120, %c0_121] : memref<6x256xf32, #tpu.memory_space<vmem>>, vector<1x256xf32>
    %405 = vector.broadcast %404 : vector<1x256xf32> to vector<64x256xf32>
    %406 = arith.mulf %381, %405 : vector<64x256xf32>
    %cst_122 = arith.constant dense<0.000000e+00> : vector<64xf32>
    %407 = vector.multi_reduction <add>, %406, %cst_122 [1] : vector<64x256xf32> to vector<64xf32>
    %408 = vector.shape_cast %407 : vector<64xf32> to vector<64x1xf32>
    %c64_123 = arith.constant 64 : index
    %c1_124 = arith.constant 1 : index
    %409 = vector.load %arg2[%c64_123, %c1_124] : memref<128x4xf32, #tpu.memory_space<vmem>>, vector<64x1xf32>
    %410 = arith.subf %409, %408 : vector<64x1xf32>
    %411 = math.absf %410 : vector<64x1xf32>
    %cst_125 = arith.constant 1.000000e+00 : f32
    %412 = vector.broadcast %cst_125 : f32 to vector<64x1xf32>
    %413 = arith.cmpf olt, %411, %412 : vector<64x1xf32>
    %cst_126 = arith.constant 5.000000e-01 : f32
    %414 = vector.broadcast %cst_126 : f32 to vector<64x1xf32>
    %415 = arith.mulf %414, %410 : vector<64x1xf32>
    %416 = arith.mulf %415, %410 : vector<64x1xf32>
    %cst_127 = arith.constant 5.000000e-01 : f32
    %417 = vector.broadcast %cst_127 : f32 to vector<64x1xf32>
    %418 = arith.subf %411, %417 : vector<64x1xf32>
    %419 = arith.select %413, %416, %418 : vector<64x1xi1>, vector<64x1xf32>
    %420 = vector.shape_cast %419 : vector<64x1xf32> to vector<1x64x1xf32>
    %cst_128 = arith.constant dense<0.000000e+00> : vector<1xf32>
    %421 = vector.multi_reduction <add>, %420, %cst_128 [1, 2] : vector<1x64x1xf32> to vector<1xf32>
    %422 = vector.shape_cast %421 : vector<1xf32> to vector<1x1x1xf32>
    %423 = vector.extract %422[0, 0, 0] : f32 from vector<1x1x1xf32>
    %424 = vector.broadcast %423 : f32 to vector<1x1xf32>
    %425 = arith.addf %403, %424 : vector<1x1xf32>
    %c5_129 = arith.constant 5 : index
    %c0_130 = arith.constant 0 : index
    %426 = vector.load %arg3[%c5_129, %c0_130] : memref<6x256xf32, #tpu.memory_space<vmem>>, vector<1x256xf32>
    %427 = vector.broadcast %426 : vector<1x256xf32> to vector<64x256xf32>
    %428 = arith.mulf %381, %427 : vector<64x256xf32>
    %cst_131 = arith.constant dense<0.000000e+00> : vector<64xf32>
    %429 = vector.multi_reduction <add>, %428, %cst_131 [1] : vector<64x256xf32> to vector<64xf32>
    %430 = vector.shape_cast %429 : vector<64xf32> to vector<64x1xf32>
    %c64_132 = arith.constant 64 : index
    %c2_133 = arith.constant 2 : index
    %431 = vector.load %arg2[%c64_132, %c2_133] : memref<128x4xf32, #tpu.memory_space<vmem>>, vector<64x1xf32>
    %432 = arith.subf %431, %430 : vector<64x1xf32>
    %433 = math.absf %432 : vector<64x1xf32>
    %cst_134 = arith.constant 1.000000e+00 : f32
    %434 = vector.broadcast %cst_134 : f32 to vector<64x1xf32>
    %435 = arith.cmpf olt, %433, %434 : vector<64x1xf32>
    %cst_135 = arith.constant 5.000000e-01 : f32
    %436 = vector.broadcast %cst_135 : f32 to vector<64x1xf32>
    %437 = arith.mulf %436, %432 : vector<64x1xf32>
    %438 = arith.mulf %437, %432 : vector<64x1xf32>
    %cst_136 = arith.constant 5.000000e-01 : f32
    %439 = vector.broadcast %cst_136 : f32 to vector<64x1xf32>
    %440 = arith.subf %433, %439 : vector<64x1xf32>
    %441 = arith.select %435, %438, %440 : vector<64x1xi1>, vector<64x1xf32>
    %442 = vector.shape_cast %441 : vector<64x1xf32> to vector<1x64x1xf32>
    %cst_137 = arith.constant dense<0.000000e+00> : vector<1xf32>
    %443 = vector.multi_reduction <add>, %442, %cst_137 [1, 2] : vector<1x64x1xf32> to vector<1xf32>
    %444 = vector.shape_cast %443 : vector<1xf32> to vector<1x1x1xf32>
    %445 = vector.extract %444[0, 0, 0] : f32 from vector<1x1x1xf32>
    %446 = vector.broadcast %445 : f32 to vector<1x1xf32>
    %447 = arith.addf %425, %446 : vector<1x1xf32>
    %cst_138 = arith.constant 0.00260416674 : f32
    %448 = vector.broadcast %cst_138 : f32 to vector<1x1xf32>
    %449 = arith.mulf %447, %448 : vector<1x1xf32>
    %cst_139 = arith.constant 2.000000e+00 : f32
    %450 = vector.broadcast %cst_139 : f32 to vector<1x1xf32>
    %451 = arith.mulf %450, %179 : vector<1x1xf32>
    %452 = arith.addf %302, %451 : vector<1x1xf32>
    %cst_140 = arith.constant 5.000000e+00 : f32
    %453 = vector.broadcast %cst_140 : f32 to vector<1x1xf32>
    %454 = arith.mulf %453, %449 : vector<1x1xf32>
    %455 = arith.addf %452, %454 : vector<1x1xf32>
    %456 = tpu.iota {dimensions = array<i32: 0>} : vector<8x128xi32>
    %c0_i32_141 = arith.constant 0 : i32
    %457 = vector.broadcast %c0_i32_141 : i32 to vector<8x128xi32>
    %458 = arith.cmpi eq, %456, %457 : vector<8x128xi32>
    %c1_i32_142 = arith.constant 1 : i32
    %459 = vector.broadcast %c1_i32_142 : i32 to vector<8x128xi32>
    %460 = arith.cmpi eq, %456, %459 : vector<8x128xi32>
    %c2_i32_143 = arith.constant 2 : i32
    %461 = vector.broadcast %c2_i32_143 : i32 to vector<8x128xi32>
    %462 = arith.cmpi eq, %456, %461 : vector<8x128xi32>
    %c3_i32_144 = arith.constant 3 : i32
    %463 = vector.broadcast %c3_i32_144 : i32 to vector<8x128xi32>
    %464 = arith.cmpi eq, %456, %463 : vector<8x128xi32>
    %cst_145 = arith.constant 0.000000e+00 : f32
    %465 = vector.shape_cast %449 : vector<1x1xf32> to vector<1x1xf32>
    %466 = vector.broadcast %465 : vector<1x1xf32> to vector<8x128xf32>
    %467 = vector.broadcast %cst_145 : f32 to vector<8x128xf32>
    %468 = arith.select %464, %466, %467 : vector<8x128xi1>, vector<8x128xf32>
    %469 = vector.shape_cast %179 : vector<1x1xf32> to vector<1x1xf32>
    %470 = vector.broadcast %469 : vector<1x1xf32> to vector<8x128xf32>
    %471 = arith.select %462, %470, %468 : vector<8x128xi1>, vector<8x128xf32>
    %472 = vector.shape_cast %302 : vector<1x1xf32> to vector<1x1xf32>
    %473 = vector.broadcast %472 : vector<1x1xf32> to vector<8x128xf32>
    %474 = arith.select %460, %473, %471 : vector<8x128xi1>, vector<8x128xf32>
    %475 = vector.shape_cast %455 : vector<1x1xf32> to vector<1x1xf32>
    %476 = vector.broadcast %475 : vector<1x1xf32> to vector<8x128xf32>
    %477 = arith.select %458, %476, %474 : vector<8x128xi1>, vector<8x128xf32>
    %c0_146 = arith.constant 0 : index
    %c0_147 = arith.constant 0 : index
    %478 = vector.load %arg4[%c0_146, %c0_147] : memref<8x128xf32, #tpu.memory_space<vmem>>, vector<8x128xf32>
    tpu.vector_store %arg4[%c0_146, %c0_147], %477 {strides = array<i32>} : memref<8x128xf32, #tpu.memory_space<vmem>>, vector<8x128xf32>,
    return
  }
}

</mosaic_0001>

<llo_original>
// kernel: loss_fn.1
$region0: #{loss_fn.1}
  #allocation0 [shape = 'u32[]', space=smem, size = 0x4, offset = 0x4, fixed_abs, tag = 'smem constant byte address 0x4 - core index']
  #allocation1 [shape = 'u32[144,128]{1,0:T(1,128)}', space=vmem, size = 0x12000, scoped, tag = 'internal scratch']
  %s0 = inlined_call_operand.vmem [shape: f32[16,8], index: 0, kind: input, shape index: {}]
  %s1 = inlined_call_operand.vmem [shape: f32[6,16,128], index: 1, kind: input, shape index: {}]
  %s2 = inlined_call_operand.vmem [shape: f32[128,4], index: 2, kind: input, shape index: {}]
  %s3 = inlined_call_operand.vmem [shape: f32[6,256], index: 3, kind: input, shape index: {}]
  %s4 = inlined_call_operand.vmem [shape: f32[8,128], index: 4, kind: output, shape index: {}]
  %s5 = sld [smem:[#allocation0]]
  $region26: #{loss_fn.1} parent=0
    _
  %s7 = ssub.s32 1, %s5
  %s8 = scalar_select 0, %s7, %s5
  // Predicated region
  $region2: #{loss_fn.1} parent=0 // pred_check
    _
  $region3: #{loss_fn.1} parent=0 // pred_check_branch
    %10 = sbr.rel (0) target = $region5
  $region4: #{loss_fn.1} parent=0 // pred_region
    _
  $region5: #{loss_fn.1} parent=0 // pred_fallthru
    _
  // Predicated region
  $region6: #{loss_fn.1} parent=0 // pred_check
    _
  $region7: #{loss_fn.1} parent=0 // pred_check_branch
    %12 = sbr.rel (0) target = $region9
  $region8: #{loss_fn.1} parent=0 // pred_region
    _
  $region9: #{loss_fn.1} parent=0 // pred_fallthru
    _
  // Predicated region
  $region10: #{loss_fn.1} parent=0 // pred_check
    _
  $region11: #{loss_fn.1} parent=0 // pred_check_branch
    %14 = sbr.rel (0) target = $region13
  $region12: #{loss_fn.1} parent=0 // pred_region
    _
  $region13: #{loss_fn.1} parent=0 // pred_fallthru
    _
  // Predicated region
  $region14: #{loss_fn.1} parent=0 // pred_check
    _
  $region15: #{loss_fn.1} parent=0 // pred_check_branch
    %16 = sbr.rel (0) target = $region17
  $region16: #{loss_fn.1} parent=0 // pred_region
    _
  $region17: #{loss_fn.1} parent=0 // pred_fallthru
    _
  %v17 = vld [vmem:[%s0] sm:$0xff]
  %v18 = vld [vmem:[%s0 + $0x8] sm:$0xff]
  %v19 = vlaneseq
  %v20 = vshrl.u32 %v19, 7
  %v21 = vadd.s32 %v20, 8
  %v22 = vmul.f32 %v17, 0.5176876
  %v23 = vmul.f32 %v18, 0.5176876
  %v24 = vmul.f32 %v17, -0.46732357
  %v25 = vmul.f32 %v18, -0.46732357
  %28 = vrot.lane.b32.xlu0 %v24, 127
  %v29 = vpop.permute.xlu0 %28
  %30 = vrot.lane.b32.xlu0 %v25, 127
  %v31 = vpop.permute.xlu0 %30
  %v34 = vadd.f32 %v22, %v29
  %v35 = vadd.f32 %v23, %v31
  %v36 = vmul.f32 %v17, -0.38577092
  %v37 = vmul.f32 %v18, -0.38577092
  %40 = vrot.lane.b32.xlu0 %v36, 126
  %v41 = vpop.permute.xlu0 %40
  %42 = vrot.lane.b32.xlu0 %v37, 126
  %v43 = vpop.permute.xlu0 %42
  %v46 = vadd.f32 %v34, %v41
  %v47 = vadd.f32 %v35, %v43
  %v48 = vmul.f32 %v17, -0.6039776
  %v49 = vmul.f32 %v18, -0.6039776
  %52 = vrot.lane.b32.xlu0 %v48, 125
  %v53 = vpop.permute.xlu0 %52
  %54 = vrot.lane.b32.xlu0 %v49, 125
  %v55 = vpop.permute.xlu0 %54
  %v58 = vadd.f32 %v46, %v53
  %v59 = vadd.f32 %v47, %v55
  %vm60 = vcmp.eq.s32.totalorder %v20, 0
  %vm61 = vcmp.eq.s32.totalorder %v21, 0
  %vm62 = vcmp.eq.s32.totalorder %v20, 8
  %vm63 = vcmp.eq.s32.totalorder %v21, 8
  %vm64 = vmor %vm60, %vm62
  %vm65 = vmor %vm61, %vm63
  %v66 = vsel %vm64, %v58, 0.0
  %v67 = vsel %vm65, %v59, 0.0
  %v68 = vadd.f32 %v66, 0.0
  %v69 = vadd.f32 %v67, 0.0
  %v70 = vmul.f32 %v17, -0.5320211
  %v71 = vmul.f32 %v18, -0.5320211
  %v72 = vmul.f32 %v17, 0.35957587
  %v73 = vmul.f32 %v18, 0.35957587
  %76 = vrot.lane.b32.xlu0 %v72, 127
  %v77 = vpop.permute.xlu0 %76
  %78 = vrot.lane.b32.xlu0 %v73, 127
  %v79 = vpop.permute.xlu0 %78
  %v82 = vadd.f32 %v70, %v77
  %v83 = vadd.f32 %v71, %v79
  %v84 = vmul.f32 %v17, 0.44207016
  %v85 = vmul.f32 %v18, 0.44207016
  %88 = vrot.lane.b32.xlu0 %v84, 126
  %v89 = vpop.permute.xlu0 %88
  %90 = vrot.lane.b32.xlu0 %v85, 126
  %v91 = vpop.permute.xlu0 %90
  %v94 = vadd.f32 %v82, %v89
  %v95 = vadd.f32 %v83, %v91
  %v96 = vmul.f32 %v17, -0.62628484
  %v97 = vmul.f32 %v18, -0.62628484
  %100 = vrot.lane.b32.xlu0 %v96, 125
  %v101 = vpop.permute.xlu0 %100
  %102 = vrot.lane.b32.xlu0 %v97, 125
  %v103 = vpop.permute.xlu0 %102
  %v106 = vadd.f32 %v94, %v101
  %v107 = vadd.f32 %v95, %v103
  %v108 = vmax.f32 %v58, %v106
  %v109 = vmax.f32 %v59, %v107
  %vm110 = vcmp.eq.s32.totalorder %v20, 1
  %vm111 = vcmp.eq.s32.totalorder %v21, 1
  %vm112 = vcmp.eq.s32.totalorder %v20, 9
  %vm113 = vcmp.eq.s32.totalorder %v21, 9
  %vm114 = vmor %vm110, %vm112
  %vm115 = vmor %vm111, %vm113
  %v116 = vsel %vm114, %v106, 0.0
  %v117 = vsel %vm115, %v107, 0.0
  %v118 = vadd.f32 %v68, %v116
  %v119 = vadd.f32 %v69, %v117
  %v120 = vmul.f32 %v17, 0.58688086
  %v121 = vmul.f32 %v18, 0.58688086
  %v122 = vmul.f32 %v17, -0.66790307
  %v123 = vmul.f32 %v18, -0.66790307
  %126 = vrot.lane.b32.xlu0 %v122, 127
  %v127 = vpop.permute.xlu0 %126
  %128 = vrot.lane.b32.xlu0 %v123, 127
  %v129 = vpop.permute.xlu0 %128
  %v132 = vadd.f32 %v120, %v127
  %v133 = vadd.f32 %v121, %v129
  %v134 = vmul.f32 %v17, -0.4552467
  %v135 = vmul.f32 %v18, -0.4552467
  %138 = vrot.lane.b32.xlu0 %v134, 126
  %v139 = vpop.permute.xlu0 %138
  %140 = vrot.lane.b32.xlu0 %v135, 126
  %v141 = vpop.permute.xlu0 %140
  %v144 = vadd.f32 %v132, %v139
  %v145 = vadd.f32 %v133, %v141
  %v146 = vmul.f32 %v17, 0.047189467
  %v147 = vmul.f32 %v18, 0.047189467
  %150 = vrot.lane.b32.xlu0 %v146, 125
  %v151 = vpop.permute.xlu0 %150
  %152 = vrot.lane.b32.xlu0 %v147, 125
  %v153 = vpop.permute.xlu0 %152
  %v156 = vadd.f32 %v144, %v151
  %v157 = vadd.f32 %v145, %v153
  %v158 = vmax.f32 %v108, %v156
  %v159 = vmax.f32 %v109, %v157
  %vm160 = vcmp.eq.s32.totalorder %v20, 2
  %vm161 = vcmp.eq.s32.totalorder %v21, 2
  %vm162 = vcmp.eq.s32.totalorder %v20, 10
  %vm163 = vcmp.eq.s32.totalorder %v21, 10
  %vm164 = vmor %vm160, %vm162
  %vm165 = vmor %vm161, %vm163
  %v166 = vsel %vm164, %v156, 0.0
  %v167 = vsel %vm165, %v157, 0.0
  %v168 = vadd.f32 %v118, %v166
  %v169 = vadd.f32 %v119, %v167
  %v170 = vmul.f32 %v17, -0.53264225
  %v171 = vmul.f32 %v18, -0.53264225
  %v172 = vmul.f32 %v17, 0.11054204
  %v173 = vmul.f32 %v18, 0.11054204
  %176 = vrot.lane.b32.xlu0 %v172, 127
  %v177 = vpop.permute.xlu0 %176
  %178 = vrot.lane.b32.xlu0 %v173, 127
  %v179 = vpop.permute.xlu0 %178
  %v182 = vadd.f32 %v170, %v177
  %v183 = vadd.f32 %v171, %v179
  %v184 = vmul.f32 %v17, 0.8060073
  %v185 = vmul.f32 %v18, 0.8060073
  %188 = vrot.lane.b32.xlu0 %v184, 126
  %v189 = vpop.permute.xlu0 %188
  %190 = vrot.lane.b32.xlu0 %v185, 126
  %v191 = vpop.permute.xlu0 %190
  %v194 = vadd.f32 %v182, %v189
  %v195 = vadd.f32 %v183, %v191
  %v196 = vmul.f32 %v17, 0.23329163
  %v197 = vmul.f32 %v18, 0.23329163
  %200 = vrot.lane.b32.xlu0 %v196, 125
  %v201 = vpop.permute.xlu0 %200
  %202 = vrot.lane.b32.xlu0 %v197, 125
  %v203 = vpop.permute.xlu0 %202
  %v206 = vadd.f32 %v194, %v201
  %v207 = vadd.f32 %v195, %v203
  %v208 = vmax.f32 %v158, %v206
  %v209 = vmax.f32 %v159, %v207
  %vm210 = vcmp.eq.s32.totalorder %v20, 3
  %vm211 = vcmp.eq.s32.totalorder %v21, 3
  %vm212 = vcmp.eq.s32.totalorder %v20, 11
  %vm213 = vcmp.eq.s32.totalorder %v21, 11
  %vm214 = vmor %vm210, %vm212
  %vm215 = vmor %vm211, %vm213
  %v216 = vsel %vm214, %v206, 0.0
  %v217 = vsel %vm215, %v207, 0.0
  %v218 = vadd.f32 %v168, %v216
  %v219 = vadd.f32 %v169, %v217
  %v220 = vmul.f32 %v17, 0.47849494
  %v221 = vmul.f32 %v18, 0.47849494
  %v222 = vmul.f32 %v17, -0.38021928
  %v223 = vmul.f32 %v18, -0.38021928
  %226 = vrot.lane.b32.xlu0 %v222, 127
  %v227 = vpop.permute.xlu0 %226
  %228 = vrot.lane.b32.xlu0 %v223, 127
  %v229 = vpop.permute.xlu0 %228
  %v232 = vadd.f32 %v220, %v227
  %v233 = vadd.f32 %v221, %v229
  %v234 = vmul.f32 %v17, 0.73628384
  %v235 = vmul.f32 %v18, 0.73628384
  %238 = vrot.lane.b32.xlu0 %v234, 126
  %v239 = vpop.permute.xlu0 %238
  %240 = vrot.lane.b32.xlu0 %v235, 126
  %v241 = vpop.permute.xlu0 %240
  %v244 = vadd.f32 %v232, %v239
  %v245 = vadd.f32 %v233, %v241
  %v246 = vmul.f32 %v17, 0.29045144
  %v247 = vmul.f32 %v18, 0.29045144
  %250 = vrot.lane.b32.xlu0 %v246, 125
  %v251 = vpop.permute.xlu0 %250
  %252 = vrot.lane.b32.xlu0 %v247, 125
  %v253 = vpop.permute.xlu0 %252
  %v256 = vadd.f32 %v244, %v251
  %v257 = vadd.f32 %v245, %v253
  %v258 = vmax.f32 %v208, %v256
  %v259 = vmax.f32 %v209, %v257
  %vm260 = vcmp.eq.s32.totalorder %v20, 4
  %vm261 = vcmp.eq.s32.totalorder %v21, 4
  %vm262 = vcmp.eq.s32.totalorder %v20, 12
  %vm263 = vcmp.eq.s32.totalorder %v21, 12
  %vm264 = vmor %vm260, %vm262
  %vm265 = vmor %vm261, %vm263
  %v266 = vsel %vm264, %v256, 0.0
  %v267 = vsel %vm265, %v257, 0.0
  %v268 = vadd.f32 %v218, %v266
  %v269 = vadd.f32 %v219, %v267
  %v270 = vmul.f32 %v17, -0.37467963
  %v271 = vmul.f32 %v18, -0.37467963
  %v272 = vmul.f32 %v17, -0.51430714
  %v273 = vmul.f32 %v18, -0.51430714
  %276 = vrot.lane.b32.xlu0 %v272, 127
  %v277 = vpop.permute.xlu0 %276
  %278 = vrot.lane.b32.xlu0 %v273, 127
  %v279 = vpop.permute.xlu0 %278
  %v282 = vadd.f32 %v270, %v277
  %v283 = vadd.f32 %v271, %v279
  %v284 = vmul.f32 %v17, 0.44807392
  %v285 = vmul.f32 %v18, 0.44807392
  %288 = vrot.lane.b32.xlu0 %v284, 126
  %v289 = vpop.permute.xlu0 %288
  %290 = vrot.lane.b32.xlu0 %v285, 126
  %v291 = vpop.permute.xlu0 %290
  %v294 = vadd.f32 %v282, %v289
  %v295 = vadd.f32 %v283, %v291
  %v296 = vmul.f32 %v17, 0.62795955
  %v297 = vmul.f32 %v18, 0.62795955
  %300 = vrot.lane.b32.xlu0 %v296, 125
  %v301 = vpop.permute.xlu0 %300
  %302 = vrot.lane.b32.xlu0 %v297, 125
  %v303 = vpop.permute.xlu0 %302
  %v306 = vadd.f32 %v294, %v301
  %v307 = vadd.f32 %v295, %v303
  %v308 = vmax.f32 %v258, %v306
  %v309 = vmax.f32 %v259, %v307
  %vm310 = vcmp.eq.s32.totalorder %v20, 5
  %vm311 = vcmp.eq.s32.totalorder %v21, 5
  %vm312 = vcmp.eq.s32.totalorder %v20, 13
  %vm313 = vcmp.eq.s32.totalorder %v21, 13
  %vm314 = vmor %vm310, %vm312
  %vm315 = vmor %vm311, %vm313
  %v316 = vsel %vm314, %v306, 0.0
  %v317 = vsel %vm315, %v307, 0.0
  %v318 = vadd.f32 %v268, %v316
  %v319 = vadd.f32 %v269, %v317
  %v320 = vmul.f32 %v17, 0.42518023
  %v321 = vmul.f32 %v18, 0.42518023
  %v322 = vmul.f32 %v17, -0.23044342
  %v323 = vmul.f32 %v18, -0.23044342
  %326 = vrot.lane.b32.xlu0 %v322, 127
  %v327 = vpop.permute.xlu0 %326
  %328 = vrot.lane.b32.xlu0 %v323, 127
  %v329 = vpop.permute.xlu0 %328
  %v332 = vadd.f32 %v320, %v327
  %v333 = vadd.f32 %v321, %v329
  %v334 = vmul.f32 %v17, 0.4158821
  %v335 = vmul.f32 %v18, 0.4158821
  %338 = vrot.lane.b32.xlu0 %v334, 126
  %v339 = vpop.permute.xlu0 %338
  %340 = vrot.lane.b32.xlu0 %v335, 126
  %v341 = vpop.permute.xlu0 %340
  %v344 = vadd.f32 %v332, %v339
  %v345 = vadd.f32 %v333, %v341
  %v346 = vmul.f32 %v17, 0.77016854
  %v347 = vmul.f32 %v18, 0.77016854
  %350 = vrot.lane.b32.xlu0 %v346, 125
  %v351 = vpop.permute.xlu0 %350
  %352 = vrot.lane.b32.xlu0 %v347, 125
  %v353 = vpop.permute.xlu0 %352
  %v356 = vadd.f32 %v344, %v351
  %v357 = vadd.f32 %v345, %v353
  %v358 = vmax.f32 %v308, %v356
  %v359 = vmax.f32 %v309, %v357
  %vm360 = vcmp.eq.s32.totalorder %v20, 6
  %vm361 = vcmp.eq.s32.totalorder %v21, 6
  %vm362 = vcmp.eq.s32.totalorder %v20, 14
  %vm363 = vcmp.eq.s32.totalorder %v21, 14
  %vm364 = vmor %vm360, %vm362
  %vm365 = vmor %vm361, %vm363
  %v366 = vsel %vm364, %v356, 0.0
  %v367 = vsel %vm365, %v357, 0.0
  %v368 = vadd.f32 %v318, %v366
  %v369 = vadd.f32 %v319, %v367
  %v370 = vmul.f32 %v17, -0.75163686
  %v371 = vmul.f32 %v18, -0.75163686
  %v372 = vmul.f32 %v17, 0.13198584
  %v373 = vmul.f32 %v18, 0.13198584
  %376 = vrot.lane.b32.xlu0 %v372, 127
  %v377 = vpop.permute.xlu0 %376
  %378 = vrot.lane.b32.xlu0 %v373, 127
  %v379 = vpop.permute.xlu0 %378
  %v382 = vadd.f32 %v370, %v377
  %v383 = vadd.f32 %v371, %v379
  %v384 = vmul.f32 %v17, 0.54293805
  %v385 = vmul.f32 %v18, 0.54293805
  %388 = vrot.lane.b32.xlu0 %v384, 126
  %v389 = vpop.permute.xlu0 %388
  %390 = vrot.lane.b32.xlu0 %v385, 126
  %v391 = vpop.permute.xlu0 %390
  %v394 = vadd.f32 %v382, %v389
  %v395 = vadd.f32 %v383, %v391
  %v396 = vmul.f32 %v17, -0.35048547
  %v397 = vmul.f32 %v18, -0.35048547
  %400 = vrot.lane.b32.xlu0 %v396, 125
  %v401 = vpop.permute.xlu0 %400
  %402 = vrot.lane.b32.xlu0 %v397, 125
  %v403 = vpop.permute.xlu0 %402
  %v406 = vadd.f32 %v394, %v401
  %v407 = vadd.f32 %v395, %v403
  %v408 = vmax.f32 %v358, %v406
  %v409 = vmax.f32 %v359, %v407
  %vm410 = vcmp.eq.s32.totalorder %v20, 7
  %vm411 = vcmp.eq.s32.totalorder %v21, 7
  %vm412 = vcmp.eq.s32.totalorder %v20, 15
  %vm413 = vcmp.eq.s32.totalorder %v21, 15
  %vm414 = vmor %vm410, %vm412
  %vm415 = vmor %vm411, %vm413
  %v416 = vsel %vm414, %v406, 0.0
  %v417 = vsel %vm415, %v407, 0.0
  %v418 = vadd.f32 %v368, %v416
  %v419 = vadd.f32 %v369, %v417
  %v420 = vsub.f32 %v408, %v418
  %v421 = vsub.f32 %v409, %v419
  %vm422 = vcmp.gt.f32.partialorder %v420, 0.001
  %vm423 = vcmp.gt.f32.partialorder %v421, 0.001
  %v424 = vsel %vm422, %v420, 0.0
  %v425 = vsel %vm423, %v421, 0.0
  %vm426 = vcmask 7168
  %v427 = vsel %vm426, %v424, 0.0
  %v428 = vsel %vm426, %v425, 0.0
  %v429 = vadd.f32 %v427, %v428
  %430 = vadd.xlane.f32.xlu0 %v429
  %v431 = vpop.xlane.xlu0 %430
  %v432 = vrot.slane %v431, 4
  %v433 = vadd.f32 %v431, %v432
  %v434 = vrot.slane %v433, 2
  %v435 = vadd.f32 %v433, %v434
  %v436 = vrot.slane %v435, 1
  %v437 = vadd.f32 %v435, %v436
  %s438 = vtos %v437
  %v439 = vstv %s438
  %v440 = vmul.f32 %v439, 0.0625
  %v441 = vmul.f32 %v17, %v17
  %v442 = vmul.f32 %v18, %v18
  %445 = vrot.lane.b32.xlu0 %v441, 127
  %v446 = vpop.permute.xlu0 %445
  %447 = vrot.lane.b32.xlu0 %v442, 127
  %v448 = vpop.permute.xlu0 %447
  %v451 = vadd.f32 %v441, %v446
  %v452 = vadd.f32 %v442, %v448
  %v453 = vmul.f32 %v451, 2.0
  %v454 = vmul.f32 %v452, 2.0
  %v455 = vsub.f32 1.0, %v453
  %v456 = vsub.f32 1.0, %v454
  %v457 = vmul.f32 %v17, 2.0
  %v458 = vmul.f32 %v18, 2.0
  %461 = vrot.lane.b32.xlu0 %v17, 127
  %v462 = vpop.permute.xlu0 %461
  %463 = vrot.lane.b32.xlu0 %v18, 127
  %v464 = vpop.permute.xlu0 %463
  %v467 = vmul.f32 %v457, %v462
  %v468 = vmul.f32 %v458, %v464
  %469 = vrot.lane.b32.xlu0 %v17, 125
  %v470 = vpop.permute.xlu0 %469
  %471 = vrot.lane.b32.xlu0 %v18, 125
  %v472 = vpop.permute.xlu0 %471
  %v475 = vmul.f32 %v457, %v470
  %v476 = vmul.f32 %v458, %v472
  %479 = vrot.lane.b32.xlu0 %v475, 1
  %v480 = vpop.permute.xlu0 %479
  %481 = vrot.lane.b32.xlu0 %v476, 1
  %v482 = vpop.permute.xlu0 %481
  %v485 = vsub.f32 %v467, %v480
  %v486 = vsub.f32 %v468, %v482
  %487 = vrot.lane.b32.xlu0 %v17, 126
  %v488 = vpop.permute.xlu0 %487
  %489 = vrot.lane.b32.xlu0 %v18, 126
  %v490 = vpop.permute.xlu0 %489
  %v493 = vmul.f32 %v457, %v488
  %v494 = vmul.f32 %v458, %v490
  %497 = vrot.lane.b32.xlu0 %v493, 127
  %v498 = vpop.permute.xlu0 %497
  %499 = vrot.lane.b32.xlu0 %v494, 127
  %v500 = vpop.permute.xlu0 %499
  %v503 = vadd.f32 %v493, %v498
  %v504 = vadd.f32 %v494, %v500
  %505 = vrot.lane.b32.xlu0 %v17, 3
  %v506 = vpop.permute.xlu0 %505
  %507 = vrot.lane.b32.xlu0 %v18, 3
  %v508 = vpop.permute.xlu0 %507
  %v511 = vmul.f32 %v457, %v506
  %v512 = vmul.f32 %v458, %v508
  %515 = vrot.lane.b32.xlu0 %v511, 126
  %v516 = vpop.permute.xlu0 %515
  %517 = vrot.lane.b32.xlu0 %v512, 126
  %v518 = vpop.permute.xlu0 %517
  %v521 = vadd.f32 %v467, %v516
  %v522 = vadd.f32 %v468, %v518
  %523 = vrot.lane.b32.xlu0 %v441, 126
  %v524 = vpop.permute.xlu0 %523
  %525 = vrot.lane.b32.xlu0 %v442, 126
  %v526 = vpop.permute.xlu0 %525
  %v529 = vadd.f32 %v441, %v524
  %v530 = vadd.f32 %v442, %v526
  %v531 = vmul.f32 %v529, 2.0
  %v532 = vmul.f32 %v530, 2.0
  %v533 = vsub.f32 1.0, %v531
  %v534 = vsub.f32 1.0, %v532
  %v535 = vmul.f32 %v17, -2.0
  %v536 = vmul.f32 %v18, -2.0
  %v537 = vmul.f32 %v535, %v462
  %v538 = vmul.f32 %v536, %v464
  %541 = vrot.lane.b32.xlu0 %v467, 126
  %v542 = vpop.permute.xlu0 %541
  %543 = vrot.lane.b32.xlu0 %v468, 126
  %v544 = vpop.permute.xlu0 %543
  %v547 = vadd.f32 %v537, %v542
  %v548 = vadd.f32 %v538, %v544
  %v549 = vmul.f32 %v535, %v488
  %v550 = vmul.f32 %v536, %v490
  %v551 = vadd.f32 %v549, %v498
  %v552 = vadd.f32 %v550, %v500
  %v553 = vadd.f32 %v467, %v542
  %v554 = vadd.f32 %v468, %v544
  %v555 = vld [vmem:[%s1] sm:$0xff]
  %v556 = vld [vmem:[%s1 + $0x8] sm:$0xff]
  %s557 = scalar_lea.vmem %s1, 16
  %v558 = vld [vmem:[%s557] sm:$0xff]
  %v559 = vld [vmem:[%s557 + $0x8] sm:$0xff]
  %s560 = scalar_lea.vmem %s1, 32
  %v561 = vld [vmem:[%s560] sm:$0xff]
  %v562 = vld [vmem:[%s560 + $0x8] sm:$0xff]
  %s563 = scalar_lea.vmem %s1, 48
  %v564 = vld [vmem:[%s563] sm:$0xff]
  %v565 = vld [vmem:[%s563 + $0x8] sm:$0xff]
  %s566 = scalar_lea.vmem %s1, 64
  %v567 = vld [vmem:[%s566] sm:$0xff]
  %v568 = vld [vmem:[%s566 + $0x8] sm:$0xff]
  %s569 = scalar_lea.vmem %s1, 80
  %v570 = vld [vmem:[%s569] sm:$0xff]
  %v571 = vld [vmem:[%s569 + $0x8] sm:$0xff]
  %573 = vset.pattern.permute.xlu0 2
  %574 = vperm.xlu0 %573, %v455
  %v575 = vpop.permute.xlu0 %574
  %578 = vset.pattern.permute.xlu0 2
  %579 = vperm.xlu0 %578, %v456
  %v580 = vpop.permute.xlu0 %579
  %v582 = vmul.f32 %v575, %v555
  %v583 = vmul.f32 %v580, %v556
  %585 = vset.pattern.permute.xlu0 1
  %586 = vperm.xlu0 %585, %v485
  %v587 = vpop.permute.xlu0 %586
  %590 = vset.pattern.permute.xlu0 1
  %591 = vperm.xlu0 %590, %v486
  %v592 = vpop.permute.xlu0 %591
  %v594 = vmul.f32 %v587, %v558
  %v595 = vmul.f32 %v592, %v559
  %v596 = vadd.f32 %v582, %v594
  %v597 = vadd.f32 %v583, %v595
  %599 = vset.pattern.permute.xlu0 0
  %600 = vperm.xlu0 %599, %v503
  %v601 = vpop.permute.xlu0 %600
  %604 = vset.pattern.permute.xlu0 0
  %605 = vperm.xlu0 %604, %v504
  %v606 = vpop.permute.xlu0 %605
  %v608 = vmul.f32 %v601, %v561
  %v609 = vmul.f32 %v606, %v562
  %v610 = vadd.f32 %v596, %v608
  %v611 = vadd.f32 %v597, %v609
  %613 = vset.pattern.permute.xlu0 1
  %614 = vperm.xlu0 %613, %v521
  %v615 = vpop.permute.xlu0 %614
  %618 = vset.pattern.permute.xlu0 1
  %619 = vperm.xlu0 %618, %v522
  %v620 = vpop.permute.xlu0 %619
  %v622 = vmul.f32 %v615, %v555
  %v623 = vmul.f32 %v620, %v556
  %625 = vset.pattern.permute.xlu0 1
  %626 = vperm.xlu0 %625, %v533
  %v627 = vpop.permute.xlu0 %626
  %630 = vset.pattern.permute.xlu0 1
  %631 = vperm.xlu0 %630, %v534
  %v632 = vpop.permute.xlu0 %631
  %v634 = vmul.f32 %v627, %v558
  %v635 = vmul.f32 %v632, %v559
  %v636 = vadd.f32 %v622, %v634
  %v637 = vadd.f32 %v623, %v635
  %639 = vset.pattern.permute.xlu0 0
  %640 = vperm.xlu0 %639, %v547
  %v641 = vpop.permute.xlu0 %640
  %644 = vset.pattern.permute.xlu0 0
  %645 = vperm.xlu0 %644, %v548
  %v646 = vpop.permute.xlu0 %645
  %v648 = vmul.f32 %v641, %v561
  %v649 = vmul.f32 %v646, %v562
  %v650 = vadd.f32 %v636, %v648
  %v651 = vadd.f32 %v637, %v649
  %653 = vset.pattern.permute.xlu0 0
  %654 = vperm.xlu0 %653, %v551
  %v655 = vpop.permute.xlu0 %654
  %658 = vset.pattern.permute.xlu0 0
  %659 = vperm.xlu0 %658, %v552
  %v660 = vpop.permute.xlu0 %659
  %v662 = vmul.f32 %v655, %v555
  %v663 = vmul.f32 %v660, %v556
  %665 = vset.pattern.permute.xlu0 0
  %666 = vperm.xlu0 %665, %v553
  %v667 = vpop.permute.xlu0 %666
  %670 = vset.pattern.permute.xlu0 0
  %671 = vperm.xlu0 %670, %v554
  %v672 = vpop.permute.xlu0 %671
  %v674 = vmul.f32 %v667, %v558
  %v675 = vmul.f32 %v672, %v559
  %v676 = vadd.f32 %v662, %v674
  %v677 = vadd.f32 %v663, %v675
  %678 = vset.pattern.permute.xlu0 1
  %679 = vperm.xlu0 %678, %v455
  %v680 = vpop.permute.xlu0 %679
  %682 = vset.pattern.permute.xlu0 1
  %683 = vperm.xlu0 %682, %v456
  %v684 = vpop.permute.xlu0 %683
  %v686 = vmul.f32 %v680, %v561
  %v687 = vmul.f32 %v684, %v562
  %v688 = vadd.f32 %v676, %v686
  %v689 = vadd.f32 %v677, %v687
  %v690 = vsub.f32 %v610, %v564
  %v691 = vsub.f32 %v611, %v565
  %v692 = vsub.f32 %v650, %v567
  %v693 = vsub.f32 %v651, %v568
  %v694 = vsub.f32 %v688, %v570
  %v695 = vsub.f32 %v689, %v571
  %v696 = vmul.f32 %v690, %v690
  %v697 = vmul.f32 %v691, %v691
  %v698 = vmul.f32 %v692, %v692
  %v699 = vmul.f32 %v693, %v693
  %v700 = vadd.f32 %v696, %v698
  %v701 = vadd.f32 %v697, %v699
  %v702 = vmul.f32 %v694, %v694
  %v703 = vmul.f32 %v695, %v695
  %v704 = vadd.f32 %v700, %v702
  %v705 = vadd.f32 %v701, %v703
  %v706 = vrsqrt.pop %v704
  %v707 = vmul.f32 %v704, %v706
  %vm708 = vcmp.eq.f32.partialorder %v704, inf
  %v709 = vsel %vm708, %v704, %v707
  %vm710 = vcmp.eq.f32.partialorder %v704, 0.0
  %v711 = vand.u32 %v704, 2147483648
  %v712 = vsel %vm710, %v711, %v709
  %v713 = vrsqrt.pop %v705
  %v714 = vmul.f32 %v705, %v713
  %vm715 = vcmp.eq.f32.partialorder %v705, inf
  %v716 = vsel %vm715, %v705, %v714
  %vm717 = vcmp.eq.f32.partialorder %v705, 0.0
  %v718 = vand.u32 %v705, 2147483648
  %v719 = vsel %vm717, %v718, %v716
  %720 = vadd.xlane.f32.xlu0 %v712
  %v721 = vpop.xlane.xlu0 %720
  %722 = vadd.xlane.f32.xlu0 %v719
  %v723 = vpop.xlane.xlu0 %722
  %v724 = vrcp.pop 128.0
  %v725 = vmul.f32 %v721, %v724
  %v726 = vmul.f32 %v723, %v724
  %727 = vrot.lane.b32.xlu0 %v17, 1
  %v728 = vpop.permute.xlu0 %727
  %729 = vrot.lane.b32.xlu0 %v18, 1
  %v730 = vpop.permute.xlu0 %729
  %v733 = vmul.f32 %v17, %v728
  %v734 = vmul.f32 %v18, %v730
  %v735 = vrcp.pop %v733
  %v736 = vmul.f32 %v725, %v735
  %v737 = vrcp.pop %v734
  %v738 = vmul.f32 %v726, %v737
  %v739 = vlog2.pop %v17
  %v740 = vmul.f32 %v739, 0.6931472
  %v741 = vlog2.pop %v18
  %v742 = vmul.f32 %v741, 0.6931472
  %745 = vrot.lane.b32.xlu0 %v740, 1
  %v746 = vpop.permute.xlu0 %745
  %747 = vrot.lane.b32.xlu0 %v742, 1
  %v748 = vpop.permute.xlu0 %747
  %v751 = vadd.f32 %v736, %v746
  %v752 = vadd.f32 %v738, %v748
  %755 = vrot.lane.b32.xlu0 %v751, 123
  %v756 = vpop.permute.xlu0 %755
  %757 = vrot.lane.b32.xlu0 %v752, 123
  %v758 = vpop.permute.xlu0 %757
  %v761 = vsel %vm426, %v756, 0.0
  %v762 = vsel %vm426, %v758, 0.0
  %v763 = vadd.f32 %v761, %v762
  %764 = vadd.xlane.f32.xlu0 %v763
  %v765 = vpop.xlane.xlu0 %764
  %v766 = vrot.slane %v765, 4
  %v767 = vadd.f32 %v765, %v766
  %v768 = vrot.slane %v767, 2
  %v769 = vadd.f32 %v767, %v768
  %v770 = vrot.slane %v769, 1
  %v771 = vadd.f32 %v769, %v770
  %s772 = vtos %v771
  %v773 = vstv %s772
  %v774 = vmul.f32 %v773, 0.125
  %v775 = vlaneseq
  %v776 = vand.u32 %v775, 127
  %v777 = vadd.s32 %v776, 128
  %v778 = vcvt.s32.f32 %v776
  %v779 = vcvt.s32.f32 %v777
  %v780 = vld [vmem:[%s2] sm:$0xff]
  %v781 = vld [vmem:[%s2 + $0x8] sm:$0xff]
  %v782 = vld [vmem:[%s2 + $0x10] sm:$0xff]
  %v783 = vld [vmem:[%s2 + $0x18] sm:$0xff]
  %v784 = vld [vmem:[%s2 + $0x20] sm:$0xff]
  %v785 = vld [vmem:[%s2 + $0x28] sm:$0xff]
  %v786 = vld [vmem:[%s2 + $0x30] sm:$0xff]
  %v787 = vld [vmem:[%s2 + $0x38] sm:$0xff]
  %789 = vset.pattern.permute.xlu0 3
  %790 = vperm.xlu0 %789, %v780
  %v791 = vpop.permute.xlu0 %790
  %794 = vset.pattern.permute.xlu0 3
  %795 = vperm.xlu0 %794, %v781
  %v796 = vpop.permute.xlu0 %795
  %799 = vset.pattern.permute.xlu0 3
  %800 = vperm.xlu0 %799, %v782
  %v801 = vpop.permute.xlu0 %800
  %804 = vset.pattern.permute.xlu0 3
  %805 = vperm.xlu0 %804, %v783
  %v806 = vpop.permute.xlu0 %805
  %809 = vset.pattern.permute.xlu0 3
  %810 = vperm.xlu0 %809, %v784
  %v811 = vpop.permute.xlu0 %810
  %814 = vset.pattern.permute.xlu0 3
  %815 = vperm.xlu0 %814, %v785
  %v816 = vpop.permute.xlu0 %815
  %819 = vset.pattern.permute.xlu0 3
  %820 = vperm.xlu0 %819, %v786
  %v821 = vpop.permute.xlu0 %820
  %824 = vset.pattern.permute.xlu0 3
  %825 = vperm.xlu0 %824, %v787
  %v826 = vpop.permute.xlu0 %825
  %vm828 = vcmp.eq.f32.partialorder %v778, %v791
  %vm829 = vcmp.eq.f32.partialorder %v779, %v791
  %vm830 = vcmp.eq.f32.partialorder %v778, %v796
  %vm831 = vcmp.eq.f32.partialorder %v779, %v796
  %vm832 = vcmp.eq.f32.partialorder %v778, %v801
  %vm833 = vcmp.eq.f32.partialorder %v779, %v801
  %vm834 = vcmp.eq.f32.partialorder %v778, %v806
  %vm835 = vcmp.eq.f32.partialorder %v779, %v806
  %vm836 = vcmp.eq.f32.partialorder %v778, %v811
  %vm837 = vcmp.eq.f32.partialorder %v779, %v811
  %vm838 = vcmp.eq.f32.partialorder %v778, %v816
  %vm839 = vcmp.eq.f32.partialorder %v779, %v816
  %vm840 = vcmp.eq.f32.partialorder %v778, %v821
  %vm841 = vcmp.eq.f32.partialorder %v779, %v821
  %vm842 = vcmp.eq.f32.partialorder %v778, %v826
  %vm843 = vcmp.eq.f32.partialorder %v779, %v826
  %v844 = vsel %vm828, 1, 0
  %v845 = vsel %vm829, 1, 0
  %v846 = vsel %vm830, 1, 0
  %v847 = vsel %vm831, 1, 0
  %v848 = vsel %vm832, 1, 0
  %v849 = vsel %vm833, 1, 0
  %v850 = vsel %vm834, 1, 0
  %v851 = vsel %vm835, 1, 0
  %v852 = vsel %vm836, 1, 0
  %v853 = vsel %vm837, 1, 0
  %v854 = vsel %vm838, 1, 0
  %v855 = vsel %vm839, 1, 0
  %v856 = vsel %vm840, 1, 0
  %v857 = vsel %vm841, 1, 0
  %v858 = vsel %vm842, 1, 0
  %v859 = vsel %vm843, 1, 0
  %v860 = vcvt.s32.f32 %v844
  %v861 = vcvt.s32.f32 %v845
  %v862 = vcvt.s32.f32 %v846
  %v863 = vcvt.s32.f32 %v847
  %v864 = vcvt.s32.f32 %v848
  %v865 = vcvt.s32.f32 %v849
  %v866 = vcvt.s32.f32 %v850
  %v867 = vcvt.s32.f32 %v851
  %v868 = vcvt.s32.f32 %v852
  %v869 = vcvt.s32.f32 %v853
  %v870 = vcvt.s32.f32 %v854
  %v871 = vcvt.s32.f32 %v855
  %v872 = vcvt.s32.f32 %v856
  %v873 = vcvt.s32.f32 %v857
  %v874 = vcvt.s32.f32 %v858
  %v875 = vcvt.s32.f32 %v859
  %v876 = vld [vmem:[%s3] ss:$8 sm:$0x3]
  %v878 = vlaneseq
  %v879 = vshrl.u32 %v878, 7
  %v880 = vsub.s32 0, %v879
  %v881 = vrot.slane %v876, %v880
  %v882 = vlaneseq
  %v883 = vshrl.u32 %v882, 7
  %v884 = vsub.s32 1, %v883
  %v885 = vrot.slane %v876, %v884
  %v888 = vmul.f32 %v860, %v881
  %v889 = vmul.f32 %v861, %v885
  %v890 = vmul.f32 %v862, %v881
  %v891 = vmul.f32 %v863, %v885
  %v892 = vmul.f32 %v864, %v881
  %v893 = vmul.f32 %v865, %v885
  %v894 = vmul.f32 %v866, %v881
  %v895 = vmul.f32 %v867, %v885
  %v896 = vmul.f32 %v868, %v881
  %v897 = vmul.f32 %v869, %v885
  %v898 = vmul.f32 %v870, %v881
  %v899 = vmul.f32 %v871, %v885
  %v900 = vmul.f32 %v872, %v881
  %v901 = vmul.f32 %v873, %v885
  %v902 = vmul.f32 %v874, %v881
  %v903 = vmul.f32 %v875, %v885
  %v904 = vadd.f32 %v888, %v889
  %905 = vadd.xlane.f32.xlu0 %v904
  %v906 = vpop.xlane.xlu0 %905
  %v907 = vadd.f32 %v890, %v891
  %908 = vadd.xlane.f32.xlu0 %v907
  %v909 = vpop.xlane.xlu0 %908
  %v910 = vadd.f32 %v892, %v893
  %911 = vadd.xlane.f32.xlu0 %v910
  %v912 = vpop.xlane.xlu0 %911
  %v913 = vadd.f32 %v894, %v895
  %914 = vadd.xlane.f32.xlu0 %v913
  %v915 = vpop.xlane.xlu0 %914
  %v916 = vadd.f32 %v896, %v897
  %917 = vadd.xlane.f32.xlu0 %v916
  %v918 = vpop.xlane.xlu0 %917
  %v919 = vadd.f32 %v898, %v899
  %920 = vadd.xlane.f32.xlu0 %v919
  %v921 = vpop.xlane.xlu0 %920
  %v922 = vadd.f32 %v900, %v901
  %923 = vadd.xlane.f32.xlu0 %v922
  %v924 = vpop.xlane.xlu0 %923
  %v925 = vadd.f32 %v902, %v903
  %926 = vadd.xlane.f32.xlu0 %v925
  %v927 = vpop.xlane.xlu0 %926
  %v928 = vsub.f32 %v780, %v906
  %v929 = vsub.f32 %v781, %v909
  %v930 = vsub.f32 %v782, %v912
  %v931 = vsub.f32 %v783, %v915
  %v932 = vsub.f32 %v784, %v918
  %v933 = vsub.f32 %v785, %v921
  %v934 = vsub.f32 %v786, %v924
  %v935 = vsub.f32 %v787, %v927
  %v936 = vand.u32 2147483647, %v928
  %v937 = vand.u32 2147483647, %v929
  %v938 = vand.u32 2147483647, %v930
  %v939 = vand.u32 2147483647, %v931
  %v940 = vand.u32 2147483647, %v932
  %v941 = vand.u32 2147483647, %v933
  %v942 = vand.u32 2147483647, %v934
  %v943 = vand.u32 2147483647, %v935
  %vm944 = vcmp.lt.f32.partialorder %v936, 1.0
  %vm945 = vcmp.lt.f32.partialorder %v937, 1.0
  %vm946 = vcmp.lt.f32.partialorder %v938, 1.0
  %vm947 = vcmp.lt.f32.partialorder %v939, 1.0
  %vm948 = vcmp.lt.f32.partialorder %v940, 1.0
  %vm949 = vcmp.lt.f32.partialorder %v941, 1.0
  %vm950 = vcmp.lt.f32.partialorder %v942, 1.0
  %vm951 = vcmp.lt.f32.partialorder %v943, 1.0
  %v952 = vmul.f32 %v928, 0.5
  %v953 = vmul.f32 %v929, 0.5
  %v954 = vmul.f32 %v930, 0.5
  %v955 = vmul.f32 %v931, 0.5
  %v956 = vmul.f32 %v932, 0.5
  %v957 = vmul.f32 %v933, 0.5
  %v958 = vmul.f32 %v934, 0.5
  %v959 = vmul.f32 %v935, 0.5
  %v960 = vmul.f32 %v952, %v928
  %v961 = vmul.f32 %v953, %v929
  %v962 = vmul.f32 %v954, %v930
  %v963 = vmul.f32 %v955, %v931
  %v964 = vmul.f32 %v956, %v932
  %v965 = vmul.f32 %v957, %v933
  %v966 = vmul.f32 %v958, %v934
  %v967 = vmul.f32 %v959, %v935
  %v968 = vsub.f32 %v936, 0.5
  %v969 = vsub.f32 %v937, 0.5
  %v970 = vsub.f32 %v938, 0.5
  %v971 = vsub.f32 %v939, 0.5
  %v972 = vsub.f32 %v940, 0.5
  %v973 = vsub.f32 %v941, 0.5
  %v974 = vsub.f32 %v942, 0.5
  %v975 = vsub.f32 %v943, 0.5
  %v976 = vsel %vm944, %v960, %v968
  %v977 = vsel %vm945, %v961, %v969
  %v978 = vsel %vm946, %v962, %v970
  %v979 = vsel %vm947, %v963, %v971
  %v980 = vsel %vm948, %v964, %v972
  %v981 = vsel %vm949, %v965, %v973
  %v982 = vsel %vm950, %v966, %v974
  %v983 = vsel %vm951, %v967, %v975
  %v984 = vsel %vm426, %v976, 0.0
  %v985 = vsel %vm426, %v977, 0.0
  %v986 = vadd.f32 %v984, %v985
  %v987 = vsel %vm426, %v978, 0.0
  %v988 = vadd.f32 %v986, %v987
  %v989 = vsel %vm426, %v979, 0.0
  %v990 = vadd.f32 %v988, %v989
  %v991 = vsel %vm426, %v980, 0.0
  %v992 = vadd.f32 %v990, %v991
  %v993 = vsel %vm426, %v981, 0.0
  %v994 = vadd.f32 %v992, %v993
  %v995 = vsel %vm426, %v982, 0.0
  %v996 = vadd.f32 %v994, %v995
  %v997 = vsel %vm426, %v983, 0.0
  %v998 = vadd.f32 %v996, %v997
  %999 = vadd.xlane.f32.xlu0 %v998
  %v1000 = vpop.xlane.xlu0 %999
  %v1001 = vrot.slane %v1000, 4
  %v1002 = vadd.f32 %v1000, %v1001
  %v1003 = vrot.slane %v1002, 2
  %v1004 = vadd.f32 %v1002, %v1003
  %v1005 = vrot.slane %v1004, 1
  %v1006 = vadd.f32 %v1004, %v1005
  %s1007 = vtos %v1006
  %v1008 = vstv %s1007
  %v1009 = vadd.f32 %v1008, 0.0
  %s1010 = scalar_lea.vmem %s3, 1
  %v1011 = vld [vmem:[%s1010] ss:$8 sm:$0x3]
  %v1013 = vlaneseq
  %v1014 = vshrl.u32 %v1013, 7
  %v1015 = vsub.s32 0, %v1014
  %v1016 = vrot.slane %v1011, %v1015
  %v1017 = vlaneseq
  %v1018 = vshrl.u32 %v1017, 7
  %v1019 = vsub.s32 1, %v1018
  %v1020 = vrot.slane %v1011, %v1019
  %v1023 = vmul.f32 %v860, %v1016
  %v1024 = vmul.f32 %v861, %v1020
  %v1025 = vmul.f32 %v862, %v1016
  %v1026 = vmul.f32 %v863, %v1020
  %v1027 = vmul.f32 %v864, %v1016
  %v1028 = vmul.f32 %v865, %v1020
  %v1029 = vmul.f32 %v866, %v1016
  %v1030 = vmul.f32 %v867, %v1020
  %v1031 = vmul.f32 %v868, %v1016
  %v1032 = vmul.f32 %v869, %v1020
  %v1033 = vmul.f32 %v870, %v1016
  %v1034 = vmul.f32 %v871, %v1020
  %v1035 = vmul.f32 %v872, %v1016
  %v1036 = vmul.f32 %v873, %v1020
  %v1037 = vmul.f32 %v874, %v1016
  %v1038 = vmul.f32 %v875, %v1020
  %v1039 = vadd.f32 %v1023, %v1024
  %1040 = vadd.xlane.f32.xlu0 %v1039
  %v1041 = vpop.xlane.xlu0 %1040
  %v1042 = vadd.f32 %v1025, %v1026
  %1043 = vadd.xlane.f32.xlu0 %v1042
  %v1044 = vpop.xlane.xlu0 %1043
  %v1045 = vadd.f32 %v1027, %v1028
  %1046 = vadd.xlane.f32.xlu0 %v1045
  %v1047 = vpop.xlane.xlu0 %1046
  %v1048 = vadd.f32 %v1029, %v1030
  %1049 = vadd.xlane.f32.xlu0 %v1048
  %v1050 = vpop.xlane.xlu0 %1049
  %v1051 = vadd.f32 %v1031, %v1032
  %1052 = vadd.xlane.f32.xlu0 %v1051
  %v1053 = vpop.xlane.xlu0 %1052
  %v1054 = vadd.f32 %v1033, %v1034
  %1055 = vadd.xlane.f32.xlu0 %v1054
  %v1056 = vpop.xlane.xlu0 %1055
  %v1057 = vadd.f32 %v1035, %v1036
  %1058 = vadd.xlane.f32.xlu0 %v1057
  %v1059 = vpop.xlane.xlu0 %1058
  %v1060 = vadd.f32 %v1037, %v1038
  %1061 = vadd.xlane.f32.xlu0 %v1060
  %v1062 = vpop.xlane.xlu0 %1061
  %v1063 = vsub.f32 %v780, %v1041
  %v1064 = vsub.f32 %v781, %v1044
  %v1065 = vsub.f32 %v782, %v1047
  %v1066 = vsub.f32 %v783, %v1050
  %v1067 = vsub.f32 %v784, %v1053
  %v1068 = vsub.f32 %v785, %v1056
  %v1069 = vsub.f32 %v786, %v1059
  %v1070 = vsub.f32 %v787, %v1062
  %v1071 = vand.u32 2147483647, %v1063
  %v1072 = vand.u32 2147483647, %v1064
  %v1073 = vand.u32 2147483647, %v1065
  %v1074 = vand.u32 2147483647, %v1066
  %v1075 = vand.u32 2147483647, %v1067
  %v1076 = vand.u32 2147483647, %v1068
  %v1077 = vand.u32 2147483647, %v1069
  %v1078 = vand.u32 2147483647, %v1070
  %vm1079 = vcmp.lt.f32.partialorder %v1071, 1.0
  %vm1080 = vcmp.lt.f32.partialorder %v1072, 1.0
  %vm1081 = vcmp.lt.f32.partialorder %v1073, 1.0
  %vm1082 = vcmp.lt.f32.partialorder %v1074, 1.0
  %vm1083 = vcmp.lt.f32.partialorder %v1075, 1.0
  %vm1084 = vcmp.lt.f32.partialorder %v1076, 1.0
  %vm1085 = vcmp.lt.f32.partialorder %v1077, 1.0
  %vm1086 = vcmp.lt.f32.partialorder %v1078, 1.0
  %v1087 = vmul.f32 %v1063, 0.5
  %v1088 = vmul.f32 %v1064, 0.5
  %v1089 = vmul.f32 %v1065, 0.5
  %v1090 = vmul.f32 %v1066, 0.5
  %v1091 = vmul.f32 %v1067, 0.5
  %v1092 = vmul.f32 %v1068, 0.5
  %v1093 = vmul.f32 %v1069, 0.5
  %v1094 = vmul.f32 %v1070, 0.5
  %v1095 = vmul.f32 %v1087, %v1063
  %v1096 = vmul.f32 %v1088, %v1064
  %v1097 = vmul.f32 %v1089, %v1065
  %v1098 = vmul.f32 %v1090, %v1066
  %v1099 = vmul.f32 %v1091, %v1067
  %v1100 = vmul.f32 %v1092, %v1068
  %v1101 = vmul.f32 %v1093, %v1069
  %v1102 = vmul.f32 %v1094, %v1070
  %v1103 = vsub.f32 %v1071, 0.5
  %v1104 = vsub.f32 %v1072, 0.5
  %v1105 = vsub.f32 %v1073, 0.5
  %v1106 = vsub.f32 %v1074, 0.5
  %v1107 = vsub.f32 %v1075, 0.5
  %v1108 = vsub.f32 %v1076, 0.5
  %v1109 = vsub.f32 %v1077, 0.5
  %v1110 = vsub.f32 %v1078, 0.5
  %v1111 = vsel %vm1079, %v1095, %v1103
  %v1112 = vsel %vm1080, %v1096, %v1104
  %v1113 = vsel %vm1081, %v1097, %v1105
  %v1114 = vsel %vm1082, %v1098, %v1106
  %v1115 = vsel %vm1083, %v1099, %v1107
  %v1116 = vsel %vm1084, %v1100, %v1108
  %v1117 = vsel %vm1085, %v1101, %v1109
  %v1118 = vsel %vm1086, %v1102, %v1110
  %1127 = vrot.lane.b32.xlu0 %v1111, 127
  %v1128 = vpop.permute.xlu0 %1127
  %1129 = vrot.lane.b32.xlu0 %v1112, 127
  %v1130 = vpop.permute.xlu0 %1129
  %1131 = vrot.lane.b32.xlu0 %v1113, 127
  %v1132 = vpop.permute.xlu0 %1131
  %1133 = vrot.lane.b32.xlu0 %v1114, 127
  %v1134 = vpop.permute.xlu0 %1133
  %1135 = vrot.lane.b32.xlu0 %v1115, 127
  %v1136 = vpop.permute.xlu0 %1135
  %1137 = vrot.lane.b32.xlu0 %v1116, 127
  %v1138 = vpop.permute.xlu0 %1137
  %1139 = vrot.lane.b32.xlu0 %v1117, 127
  %v1140 = vpop.permute.xlu0 %1139
  %1141 = vrot.lane.b32.xlu0 %v1118, 127
  %v1142 = vpop.permute.xlu0 %1141
  %v1151 = vsel %vm426, %v1128, 0.0
  %v1152 = vsel %vm426, %v1130, 0.0
  %v1153 = vadd.f32 %v1151, %v1152
  %v1154 = vsel %vm426, %v1132, 0.0
  %v1155 = vadd.f32 %v1153, %v1154
  %v1156 = vsel %vm426, %v1134, 0.0
  %v1157 = vadd.f32 %v1155, %v1156
  %v1158 = vsel %vm426, %v1136, 0.0
  %v1159 = vadd.f32 %v1157, %v1158
  %v1160 = vsel %vm426, %v1138, 0.0
  %v1161 = vadd.f32 %v1159, %v1160
  %v1162 = vsel %vm426, %v1140, 0.0
  %v1163 = vadd.f32 %v1161, %v1162
  %v1164 = vsel %vm426, %v1142, 0.0
  %v1165 = vadd.f32 %v1163, %v1164
  %1166 = vadd.xlane.f32.xlu0 %v1165
  %v1167 = vpop.xlane.xlu0 %1166
  %v1168 = vrot.slane %v1167, 4
  %v1169 = vadd.f32 %v1167, %v1168
  %v1170 = vrot.slane %v1169, 2
  %v1171 = vadd.f32 %v1169, %v1170
  %v1172 = vrot.slane %v1171, 1
  %v1173 = vadd.f32 %v1171, %v1172
  %s1174 = vtos %v1173
  %v1175 = vstv %s1174
  %v1176 = vadd.f32 %v1009, %v1175
  %s1177 = scalar_lea.vmem %s3, 2
  %v1178 = vld [vmem:[%s1177] ss:$8 sm:$0x3]
  %v1180 = vlaneseq
  %v1181 = vshrl.u32 %v1180, 7
  %v1182 = vsub.s32 0, %v1181
  %v1183 = vrot.slane %v1178, %v1182
  %v1184 = vlaneseq
  %v1185 = vshrl.u32 %v1184, 7
  %v1186 = vsub.s32 1, %v1185
  %v1187 = vrot.slane %v1178, %v1186
  %v1190 = vmul.f32 %v860, %v1183
  %v1191 = vmul.f32 %v861, %v1187
  %v1192 = vmul.f32 %v862, %v1183
  %v1193 = vmul.f32 %v863, %v1187
  %v1194 = vmul.f32 %v864, %v1183
  %v1195 = vmul.f32 %v865, %v1187
  %v1196 = vmul.f32 %v866, %v1183
  %v1197 = vmul.f32 %v867, %v1187
  %v1198 = vmul.f32 %v868, %v1183
  %v1199 = vmul.f32 %v869, %v1187
  %v1200 = vmul.f32 %v870, %v1183
  %v1201 = vmul.f32 %v871, %v1187
  %v1202 = vmul.f32 %v872, %v1183
  %v1203 = vmul.f32 %v873, %v1187
  %v1204 = vmul.f32 %v874, %v1183
  %v1205 = vmul.f32 %v875, %v1187
  %v1206 = vadd.f32 %v1190, %v1191
  %1207 = vadd.xlane.f32.xlu0 %v1206
  %v1208 = vpop.xlane.xlu0 %1207
  %v1209 = vadd.f32 %v1192, %v1193
  %1210 = vadd.xlane.f32.xlu0 %v1209
  %v1211 = vpop.xlane.xlu0 %1210
  %v1212 = vadd.f32 %v1194, %v1195
  %1213 = vadd.xlane.f32.xlu0 %v1212
  %v1214 = vpop.xlane.xlu0 %1213
  %v1215 = vadd.f32 %v1196, %v1197
  %1216 = vadd.xlane.f32.xlu0 %v1215
  %v1217 = vpop.xlane.xlu0 %1216
  %v1218 = vadd.f32 %v1198, %v1199
  %1219 = vadd.xlane.f32.xlu0 %v1218
  %v1220 = vpop.xlane.xlu0 %1219
  %v1221 = vadd.f32 %v1200, %v1201
  %1222 = vadd.xlane.f32.xlu0 %v1221
  %v1223 = vpop.xlane.xlu0 %1222
  %v1224 = vadd.f32 %v1202, %v1203
  %1225 = vadd.xlane.f32.xlu0 %v1224
  %v1226 = vpop.xlane.xlu0 %1225
  %v1227 = vadd.f32 %v1204, %v1205
  %1228 = vadd.xlane.f32.xlu0 %v1227
  %v1229 = vpop.xlane.xlu0 %1228
  %v1230 = vsub.f32 %v780, %v1208
  %v1231 = vsub.f32 %v781, %v1211
  %v1232 = vsub.f32 %v782, %v1214
  %v1233 = vsub.f32 %v783, %v1217
  %v1234 = vsub.f32 %v784, %v1220
  %v1235 = vsub.f32 %v785, %v1223
  %v1236 = vsub.f32 %v786, %v1226
  %v1237 = vsub.f32 %v787, %v1229
  %v1238 = vand.u32 2147483647, %v1230
  %v1239 = vand.u32 2147483647, %v1231
  %v1240 = vand.u32 2147483647, %v1232
  %v1241 = vand.u32 2147483647, %v1233
  %v1242 = vand.u32 2147483647, %v1234
  %v1243 = vand.u32 2147483647, %v1235
  %v1244 = vand.u32 2147483647, %v1236
  %v1245 = vand.u32 2147483647, %v1237
  %vm1246 = vcmp.lt.f32.partialorder %v1238, 1.0
  %vm1247 = vcmp.lt.f32.partialorder %v1239, 1.0
  %vm1248 = vcmp.lt.f32.partialorder %v1240, 1.0
  %vm1249 = vcmp.lt.f32.partialorder %v1241, 1.0
  %vm1250 = vcmp.lt.f32.partialorder %v1242, 1.0
  %vm1251 = vcmp.lt.f32.partialorder %v1243, 1.0
  %vm1252 = vcmp.lt.f32.partialorder %v1244, 1.0
  %vm1253 = vcmp.lt.f32.partialorder %v1245, 1.0
  %v1254 = vmul.f32 %v1230, 0.5
  %v1255 = vmul.f32 %v1231, 0.5
  %v1256 = vmul.f32 %v1232, 0.5
  %v1257 = vmul.f32 %v1233, 0.5
  %v1258 = vmul.f32 %v1234, 0.5
  %v1259 = vmul.f32 %v1235, 0.5
  %v1260 = vmul.f32 %v1236, 0.5
  %v1261 = vmul.f32 %v1237, 0.5
  %v1262 = vmul.f32 %v1254, %v1230
  %v1263 = vmul.f32 %v1255, %v1231
  %v1264 = vmul.f32 %v1256, %v1232
  %v1265 = vmul.f32 %v1257, %v1233
  %v1266 = vmul.f32 %v1258, %v1234
  %v1267 = vmul.f32 %v1259, %v1235
  %v1268 = vmul.f32 %v1260, %v1236
  %v1269 = vmul.f32 %v1261, %v1237
  %v1270 = vsub.f32 %v1238, 0.5
  %v1271 = vsub.f32 %v1239, 0.5
  %v1272 = vsub.f32 %v1240, 0.5
  %v1273 = vsub.f32 %v1241, 0.5
  %v1274 = vsub.f32 %v1242, 0.5
  %v1275 = vsub.f32 %v1243, 0.5
  %v1276 = vsub.f32 %v1244, 0.5
  %v1277 = vsub.f32 %v1245, 0.5
  %v1278 = vsel %vm1246, %v1262, %v1270
  %v1279 = vsel %vm1247, %v1263, %v1271
  %v1280 = vsel %vm1248, %v1264, %v1272
  %v1281 = vsel %vm1249, %v1265, %v1273
  %v1282 = vsel %vm1250, %v1266, %v1274
  %v1283 = vsel %vm1251, %v1267, %v1275
  %v1284 = vsel %vm1252, %v1268, %v1276
  %v1285 = vsel %vm1253, %v1269, %v1277
  %1294 = vrot.lane.b32.xlu0 %v1278, 126
  %v1295 = vpop.permute.xlu0 %1294
  %1296 = vrot.lane.b32.xlu0 %v1279, 126
  %v1297 = vpop.permute.xlu0 %1296
  %1298 = vrot.lane.b32.xlu0 %v1280, 126
  %v1299 = vpop.permute.xlu0 %1298
  %1300 = vrot.lane.b32.xlu0 %v1281, 126
  %v1301 = vpop.permute.xlu0 %1300
  %1302 = vrot.lane.b32.xlu0 %v1282, 126
  %v1303 = vpop.permute.xlu0 %1302
  %1304 = vrot.lane.b32.xlu0 %v1283, 126
  %v1305 = vpop.permute.xlu0 %1304
  %1306 = vrot.lane.b32.xlu0 %v1284, 126
  %v1307 = vpop.permute.xlu0 %1306
  %1308 = vrot.lane.b32.xlu0 %v1285, 126
  %v1309 = vpop.permute.xlu0 %1308
  %v1318 = vsel %vm426, %v1295, 0.0
  %v1319 = vsel %vm426, %v1297, 0.0
  %v1320 = vadd.f32 %v1318, %v1319
  %v1321 = vsel %vm426, %v1299, 0.0
  %v1322 = vadd.f32 %v1320, %v1321
  %v1323 = vsel %vm426, %v1301, 0.0
  %v1324 = vadd.f32 %v1322, %v1323
  %v1325 = vsel %vm426, %v1303, 0.0
  %v1326 = vadd.f32 %v1324, %v1325
  %v1327 = vsel %vm426, %v1305, 0.0
  %v1328 = vadd.f32 %v1326, %v1327
  %v1329 = vsel %vm426, %v1307, 0.0
  %v1330 = vadd.f32 %v1328, %v1329
  %v1331 = vsel %vm426, %v1309, 0.0
  %v1332 = vadd.f32 %v1330, %v1331
  %1333 = vadd.xlane.f32.xlu0 %v1332
  %v1334 = vpop.xlane.xlu0 %1333
  %v1335 = vrot.slane %v1334, 4
  %v1336 = vadd.f32 %v1334, %v1335
  %v1337 = vrot.slane %v1336, 2
  %v1338 = vadd.f32 %v1336, %v1337
  %v1339 = vrot.slane %v1338, 1
  %v1340 = vadd.f32 %v1338, %v1339
  %s1341 = vtos %v1340
  %v1342 = vstv %s1341
  %v1343 = vadd.f32 %v1176, %v1342
  %v1344 = vld [vmem:[%s2 + $0x40] sm:$0xff]
  %v1345 = vld [vmem:[%s2 + $0x48] sm:$0xff]
  %v1346 = vld [vmem:[%s2 + $0x50] sm:$0xff]
  %v1347 = vld [vmem:[%s2 + $0x58] sm:$0xff]
  %v1348 = vld [vmem:[%s2 + $0x60] sm:$0xff]
  %v1349 = vld [vmem:[%s2 + $0x68] sm:$0xff]
  %v1350 = vld [vmem:[%s2 + $0x70] sm:$0xff]
  %v1351 = vld [vmem:[%s2 + $0x78] sm:$0xff]
  %1353 = vset.pattern.permute.xlu0 3
  %1354 = vperm.xlu0 %1353, %v1344
  %v1355 = vpop.permute.xlu0 %1354
  %1358 = vset.pattern.permute.xlu0 3
  %1359 = vperm.xlu0 %1358, %v1345
  %v1360 = vpop.permute.xlu0 %1359
  %1363 = vset.pattern.permute.xlu0 3
  %1364 = vperm.xlu0 %1363, %v1346
  %v1365 = vpop.permute.xlu0 %1364
  %1368 = vset.pattern.permute.xlu0 3
  %1369 = vperm.xlu0 %1368, %v1347
  %v1370 = vpop.permute.xlu0 %1369
  %1373 = vset.pattern.permute.xlu0 3
  %1374 = vperm.xlu0 %1373, %v1348
  %v1375 = vpop.permute.xlu0 %1374
  %1378 = vset.pattern.permute.xlu0 3
  %1379 = vperm.xlu0 %1378, %v1349
  %v1380 = vpop.permute.xlu0 %1379
  %1383 = vset.pattern.permute.xlu0 3
  %1384 = vperm.xlu0 %1383, %v1350
  %v1385 = vpop.permute.xlu0 %1384
  %1388 = vset.pattern.permute.xlu0 3
  %1389 = vperm.xlu0 %1388, %v1351
  %v1390 = vpop.permute.xlu0 %1389
  %vm1392 = vcmp.eq.f32.partialorder %v778, %v1355
  %vm1393 = vcmp.eq.f32.partialorder %v779, %v1355
  %vm1394 = vcmp.eq.f32.partialorder %v778, %v1360
  %vm1395 = vcmp.eq.f32.partialorder %v779, %v1360
  %vm1396 = vcmp.eq.f32.partialorder %v778, %v1365
  %vm1397 = vcmp.eq.f32.partialorder %v779, %v1365
  %vm1398 = vcmp.eq.f32.partialorder %v778, %v1370
  %vm1399 = vcmp.eq.f32.partialorder %v779, %v1370
  %vm1400 = vcmp.eq.f32.partialorder %v778, %v1375
  %vm1401 = vcmp.eq.f32.partialorder %v779, %v1375
  %vm1402 = vcmp.eq.f32.partialorder %v778, %v1380
  %vm1403 = vcmp.eq.f32.partialorder %v779, %v1380
  %vm1404 = vcmp.eq.f32.partialorder %v778, %v1385
  %vm1405 = vcmp.eq.f32.partialorder %v779, %v1385
  %vm1406 = vcmp.eq.f32.partialorder %v778, %v1390
  %vm1407 = vcmp.eq.f32.partialorder %v779, %v1390
  %v1408 = vsel %vm1392, 1, 0
  %v1409 = vsel %vm1393, 1, 0
  %v1410 = vsel %vm1394, 1, 0
  %v1411 = vsel %vm1395, 1, 0
  %v1412 = vsel %vm1396, 1, 0
  %v1413 = vsel %vm1397, 1, 0
  %v1414 = vsel %vm1398, 1, 0
  %v1415 = vsel %vm1399, 1, 0
  %v1416 = vsel %vm1400, 1, 0
  %v1417 = vsel %vm1401, 1, 0
  %v1418 = vsel %vm1402, 1, 0
  %v1419 = vsel %vm1403, 1, 0
  %v1420 = vsel %vm1404, 1, 0
  %v1421 = vsel %vm1405, 1, 0
  %v1422 = vsel %vm1406, 1, 0
  %v1423 = vsel %vm1407, 1, 0
  %v1424 = vcvt.s32.f32 %v1408
  %v1425 = vcvt.s32.f32 %v1409
  %v1426 = vcvt.s32.f32 %v1410
  %v1427 = vcvt.s32.f32 %v1411
  %v1428 = vcvt.s32.f32 %v1412
  %v1429 = vcvt.s32.f32 %v1413
  %v1430 = vcvt.s32.f32 %v1414
  %v1431 = vcvt.s32.f32 %v1415
  %v1432 = vcvt.s32.f32 %v1416
  %v1433 = vcvt.s32.f32 %v1417
  %v1434 = vcvt.s32.f32 %v1418
  %v1435 = vcvt.s32.f32 %v1419
  %v1436 = vcvt.s32.f32 %v1420
  %v1437 = vcvt.s32.f32 %v1421
  %v1438 = vcvt.s32.f32 %v1422
  %v1439 = vcvt.s32.f32 %v1423
  %s1440 = scalar_lea.vmem %s3, 3
  %v1441 = vld [vmem:[%s1440] ss:$8 sm:$0x3]
  %v1443 = vlaneseq
  %v1444 = vshrl.u32 %v1443, 7
  %v1445 = vsub.s32 0, %v1444
  %v1446 = vrot.slane %v1441, %v1445
  %v1447 = vlaneseq
  %v1448 = vshrl.u32 %v1447, 7
  %v1449 = vsub.s32 1, %v1448
  %v1450 = vrot.slane %v1441, %v1449
  %v1453 = vmul.f32 %v1424, %v1446
  %v1454 = vmul.f32 %v1425, %v1450
  %v1455 = vmul.f32 %v1426, %v1446
  %v1456 = vmul.f32 %v1427, %v1450
  %v1457 = vmul.f32 %v1428, %v1446
  %v1458 = vmul.f32 %v1429, %v1450
  %v1459 = vmul.f32 %v1430, %v1446
  %v1460 = vmul.f32 %v1431, %v1450
  %v1461 = vmul.f32 %v1432, %v1446
  %v1462 = vmul.f32 %v1433, %v1450
  %v1463 = vmul.f32 %v1434, %v1446
  %v1464 = vmul.f32 %v1435, %v1450
  %v1465 = vmul.f32 %v1436, %v1446
  %v1466 = vmul.f32 %v1437, %v1450
  %v1467 = vmul.f32 %v1438, %v1446
  %v1468 = vmul.f32 %v1439, %v1450
  %v1469 = vadd.f32 %v1453, %v1454
  %1470 = vadd.xlane.f32.xlu0 %v1469
  %v1471 = vpop.xlane.xlu0 %1470
  %v1472 = vadd.f32 %v1455, %v1456
  %1473 = vadd.xlane.f32.xlu0 %v1472
  %v1474 = vpop.xlane.xlu0 %1473
  %v1475 = vadd.f32 %v1457, %v1458
  %1476 = vadd.xlane.f32.xlu0 %v1475
  %v1477 = vpop.xlane.xlu0 %1476
  %v1478 = vadd.f32 %v1459, %v1460
  %1479 = vadd.xlane.f32.xlu0 %v1478
  %v1480 = vpop.xlane.xlu0 %1479
  %v1481 = vadd.f32 %v1461, %v1462
  %1482 = vadd.xlane.f32.xlu0 %v1481
  %v1483 = vpop.xlane.xlu0 %1482
  %v1484 = vadd.f32 %v1463, %v1464
  %1485 = vadd.xlane.f32.xlu0 %v1484
  %v1486 = vpop.xlane.xlu0 %1485
  %v1487 = vadd.f32 %v1465, %v1466
  %1488 = vadd.xlane.f32.xlu0 %v1487
  %v1489 = vpop.xlane.xlu0 %1488
  %v1490 = vadd.f32 %v1467, %v1468
  %1491 = vadd.xlane.f32.xlu0 %v1490
  %v1492 = vpop.xlane.xlu0 %1491
  %v1493 = vsub.f32 %v1344, %v1471
  %v1494 = vsub.f32 %v1345, %v1474
  %v1495 = vsub.f32 %v1346, %v1477
  %v1496 = vsub.f32 %v1347, %v1480
  %v1497 = vsub.f32 %v1348, %v1483
  %v1498 = vsub.f32 %v1349, %v1486
  %v1499 = vsub.f32 %v1350, %v1489
  %v1500 = vsub.f32 %v1351, %v1492
  %v1501 = vand.u32 2147483647, %v1493
  %v1502 = vand.u32 2147483647, %v1494
  %v1503 = vand.u32 2147483647, %v1495
  %v1504 = vand.u32 2147483647, %v1496
  %v1505 = vand.u32 2147483647, %v1497
  %v1506 = vand.u32 2147483647, %v1498
  %v1507 = vand.u32 2147483647, %v1499
  %v1508 = vand.u32 2147483647, %v1500
  %vm1509 = vcmp.lt.f32.partialorder %v1501, 1.0
  %vm1510 = vcmp.lt.f32.partialorder %v1502, 1.0
  %vm1511 = vcmp.lt.f32.partialorder %v1503, 1.0
  %vm1512 = vcmp.lt.f32.partialorder %v1504, 1.0
  %vm1513 = vcmp.lt.f32.partialorder %v1505, 1.0
  %vm1514 = vcmp.lt.f32.partialorder %v1506, 1.0
  %vm1515 = vcmp.lt.f32.partialorder %v1507, 1.0
  %vm1516 = vcmp.lt.f32.partialorder %v1508, 1.0
  %v1517 = vmul.f32 %v1493, 0.5
  %v1518 = vmul.f32 %v1494, 0.5
  %v1519 = vmul.f32 %v1495, 0.5
  %v1520 = vmul.f32 %v1496, 0.5
  %v1521 = vmul.f32 %v1497, 0.5
  %v1522 = vmul.f32 %v1498, 0.5
  %v1523 = vmul.f32 %v1499, 0.5
  %v1524 = vmul.f32 %v1500, 0.5
  %v1525 = vmul.f32 %v1517, %v1493
  %v1526 = vmul.f32 %v1518, %v1494
  %v1527 = vmul.f32 %v1519, %v1495
  %v1528 = vmul.f32 %v1520, %v1496
  %v1529 = vmul.f32 %v1521, %v1497
  %v1530 = vmul.f32 %v1522, %v1498
  %v1531 = vmul.f32 %v1523, %v1499
  %v1532 = vmul.f32 %v1524, %v1500
  %v1533 = vsub.f32 %v1501, 0.5
  %v1534 = vsub.f32 %v1502, 0.5
  %v1535 = vsub.f32 %v1503, 0.5
  %v1536 = vsub.f32 %v1504, 0.5
  %v1537 = vsub.f32 %v1505, 0.5
  %v1538 = vsub.f32 %v1506, 0.5
  %v1539 = vsub.f32 %v1507, 0.5
  %v1540 = vsub.f32 %v1508, 0.5
  %v1541 = vsel %vm1509, %v1525, %v1533
  %v1542 = vsel %vm1510, %v1526, %v1534
  %v1543 = vsel %vm1511, %v1527, %v1535
  %v1544 = vsel %vm1512, %v1528, %v1536
  %v1545 = vsel %vm1513, %v1529, %v1537
  %v1546 = vsel %vm1514, %v1530, %v1538
  %v1547 = vsel %vm1515, %v1531, %v1539
  %v1548 = vsel %vm1516, %v1532, %v1540
  %v1549 = vsel %vm426, %v1541, 0.0
  %v1550 = vsel %vm426, %v1542, 0.0
  %v1551 = vadd.f32 %v1549, %v1550
  %v1552 = vsel %vm426, %v1543, 0.0
  %v1553 = vadd.f32 %v1551, %v1552
  %v1554 = vsel %vm426, %v1544, 0.0
  %v1555 = vadd.f32 %v1553, %v1554
  %v1556 = vsel %vm426, %v1545, 0.0
  %v1557 = vadd.f32 %v1555, %v1556
  %v1558 = vsel %vm426, %v1546, 0.0
  %v1559 = vadd.f32 %v1557, %v1558
  %v1560 = vsel %vm426, %v1547, 0.0
  %v1561 = vadd.f32 %v1559, %v1560
  %v1562 = vsel %vm426, %v1548, 0.0
  %v1563 = vadd.f32 %v1561, %v1562
  %1564 = vadd.xlane.f32.xlu0 %v1563
  %v1565 = vpop.xlane.xlu0 %1564
  %v1566 = vrot.slane %v1565, 4
  %v1567 = vadd.f32 %v1565, %v1566
  %v1568 = vrot.slane %v1567, 2
  %v1569 = vadd.f32 %v1567, %v1568
  %v1570 = vrot.slane %v1569, 1
  %v1571 = vadd.f32 %v1569, %v1570
  %s1572 = vtos %v1571
  %v1573 = vstv %s1572
  %v1574 = vadd.f32 %v1343, %v1573
  %s1575 = scalar_lea.vmem %s3, 4
  %v1576 = vld [vmem:[%s1575] ss:$8 sm:$0x3]
  %v1578 = vlaneseq
  %v1579 = vshrl.u32 %v1578, 7
  %v1580 = vsub.s32 0, %v1579
  %v1581 = vrot.slane %v1576, %v1580
  %v1582 = vlaneseq
  %v1583 = vshrl.u32 %v1582, 7
  %v1584 = vsub.s32 1, %v1583
  %v1585 = vrot.slane %v1576, %v1584
  %v1588 = vmul.f32 %v1424, %v1581
  %v1589 = vmul.f32 %v1425, %v1585
  %v1590 = vmul.f32 %v1426, %v1581
  %v1591 = vmul.f32 %v1427, %v1585
  %v1592 = vmul.f32 %v1428, %v1581
  %v1593 = vmul.f32 %v1429, %v1585
  %v1594 = vmul.f32 %v1430, %v1581
  %v1595 = vmul.f32 %v1431, %v1585
  %v1596 = vmul.f32 %v1432, %v1581
  %v1597 = vmul.f32 %v1433, %v1585
  %v1598 = vmul.f32 %v1434, %v1581
  %v1599 = vmul.f32 %v1435, %v1585
  %v1600 = vmul.f32 %v1436, %v1581
  %v1601 = vmul.f32 %v1437, %v1585
  %v1602 = vmul.f32 %v1438, %v1581
  %v1603 = vmul.f32 %v1439, %v1585
  %v1604 = vadd.f32 %v1588, %v1589
  %1605 = vadd.xlane.f32.xlu0 %v1604
  %v1606 = vpop.xlane.xlu0 %1605
  %v1607 = vadd.f32 %v1590, %v1591
  %1608 = vadd.xlane.f32.xlu0 %v1607
  %v1609 = vpop.xlane.xlu0 %1608
  %v1610 = vadd.f32 %v1592, %v1593
  %1611 = vadd.xlane.f32.xlu0 %v1610
  %v1612 = vpop.xlane.xlu0 %1611
  %v1613 = vadd.f32 %v1594, %v1595
  %1614 = vadd.xlane.f32.xlu0 %v1613
  %v1615 = vpop.xlane.xlu0 %1614
  %v1616 = vadd.f32 %v1596, %v1597
  %1617 = vadd.xlane.f32.xlu0 %v1616
  %v1618 = vpop.xlane.xlu0 %1617
  %v1619 = vadd.f32 %v1598, %v1599
  %1620 = vadd.xlane.f32.xlu0 %v1619
  %v1621 = vpop.xlane.xlu0 %1620
  %v1622 = vadd.f32 %v1600, %v1601
  %1623 = vadd.xlane.f32.xlu0 %v1622
  %v1624 = vpop.xlane.xlu0 %1623
  %v1625 = vadd.f32 %v1602, %v1603
  %1626 = vadd.xlane.f32.xlu0 %v1625
  %v1627 = vpop.xlane.xlu0 %1626
  %v1628 = vsub.f32 %v1344, %v1606
  %v1629 = vsub.f32 %v1345, %v1609
  %v1630 = vsub.f32 %v1346, %v1612
  %v1631 = vsub.f32 %v1347, %v1615
  %v1632 = vsub.f32 %v1348, %v1618
  %v1633 = vsub.f32 %v1349, %v1621
  %v1634 = vsub.f32 %v1350, %v1624
  %v1635 = vsub.f32 %v1351, %v1627
  %v1636 = vand.u32 2147483647, %v1628
  %v1637 = vand.u32 2147483647, %v1629
  %v1638 = vand.u32 2147483647, %v1630
  %v1639 = vand.u32 2147483647, %v1631
  %v1640 = vand.u32 2147483647, %v1632
  %v1641 = vand.u32 2147483647, %v1633
  %v1642 = vand.u32 2147483647, %v1634
  %v1643 = vand.u32 2147483647, %v1635
  %vm1644 = vcmp.lt.f32.partialorder %v1636, 1.0
  %vm1645 = vcmp.lt.f32.partialorder %v1637, 1.0
  %vm1646 = vcmp.lt.f32.partialorder %v1638, 1.0
  %vm1647 = vcmp.lt.f32.partialorder %v1639, 1.0
  %vm1648 = vcmp.lt.f32.partialorder %v1640, 1.0
  %vm1649 = vcmp.lt.f32.partialorder %v1641, 1.0
  %vm1650 = vcmp.lt.f32.partialorder %v1642, 1.0
  %vm1651 = vcmp.lt.f32.partialorder %v1643, 1.0
  %v1652 = vmul.f32 %v1628, 0.5
  %v1653 = vmul.f32 %v1629, 0.5
  %v1654 = vmul.f32 %v1630, 0.5
  %v1655 = vmul.f32 %v1631, 0.5
  %v1656 = vmul.f32 %v1632, 0.5
  %v1657 = vmul.f32 %v1633, 0.5
  %v1658 = vmul.f32 %v1634, 0.5
  %v1659 = vmul.f32 %v1635, 0.5
  %v1660 = vmul.f32 %v1652, %v1628
  %v1661 = vmul.f32 %v1653, %v1629
  %v1662 = vmul.f32 %v1654, %v1630
  %v1663 = vmul.f32 %v1655, %v1631
  %v1664 = vmul.f32 %v1656, %v1632
  %v1665 = vmul.f32 %v1657, %v1633
  %v1666 = vmul.f32 %v1658, %v1634
  %v1667 = vmul.f32 %v1659, %v1635
  %v1668 = vsub.f32 %v1636, 0.5
  %v1669 = vsub.f32 %v1637, 0.5
  %v1670 = vsub.f32 %v1638, 0.5
  %v1671 = vsub.f32 %v1639, 0.5
  %v1672 = vsub.f32 %v1640, 0.5
  %v1673 = vsub.f32 %v1641, 0.5
  %v1674 = vsub.f32 %v1642, 0.5
  %v1675 = vsub.f32 %v1643, 0.5
  %v1676 = vsel %vm1644, %v1660, %v1668
  %v1677 = vsel %vm1645, %v1661, %v1669
  %v1678 = vsel %vm1646, %v1662, %v1670
  %v1679 = vsel %vm1647, %v1663, %v1671
  %v1680 = vsel %vm1648, %v1664, %v1672
  %v1681 = vsel %vm1649, %v1665, %v1673
  %v1682 = vsel %vm1650, %v1666, %v1674
  %v1683 = vsel %vm1651, %v1667, %v1675
  %1692 = vrot.lane.b32.xlu0 %v1676, 127
  %v1693 = vpop.permute.xlu0 %1692
  %1694 = vrot.lane.b32.xlu0 %v1677, 127
  %v1695 = vpop.permute.xlu0 %1694
  %1696 = vrot.lane.b32.xlu0 %v1678, 127
  %v1697 = vpop.permute.xlu0 %1696
  %1698 = vrot.lane.b32.xlu0 %v1679, 127
  %v1699 = vpop.permute.xlu0 %1698
  %1700 = vrot.lane.b32.xlu0 %v1680, 127
  %v1701 = vpop.permute.xlu0 %1700
  %1702 = vrot.lane.b32.xlu0 %v1681, 127
  %v1703 = vpop.permute.xlu0 %1702
  %1704 = vrot.lane.b32.xlu0 %v1682, 127
  %v1705 = vpop.permute.xlu0 %1704
  %1706 = vrot.lane.b32.xlu0 %v1683, 127
  %v1707 = vpop.permute.xlu0 %1706
  %v1716 = vsel %vm426, %v1693, 0.0
  %v1717 = vsel %vm426, %v1695, 0.0
  %v1718 = vadd.f32 %v1716, %v1717
  %v1719 = vsel %vm426, %v1697, 0.0
  %v1720 = vadd.f32 %v1718, %v1719
  %v1721 = vsel %vm426, %v1699, 0.0
  %v1722 = vadd.f32 %v1720, %v1721
  %v1723 = vsel %vm426, %v1701, 0.0
  %v1724 = vadd.f32 %v1722, %v1723
  %v1725 = vsel %vm426, %v1703, 0.0
  %v1726 = vadd.f32 %v1724, %v1725
  %v1727 = vsel %vm426, %v1705, 0.0
  %v1728 = vadd.f32 %v1726, %v1727
  %v1729 = vsel %vm426, %v1707, 0.0
  %v1730 = vadd.f32 %v1728, %v1729
  %1731 = vadd.xlane.f32.xlu0 %v1730
  %v1732 = vpop.xlane.xlu0 %1731
  %v1733 = vrot.slane %v1732, 4
  %v1734 = vadd.f32 %v1732, %v1733
  %v1735 = vrot.slane %v1734, 2
  %v1736 = vadd.f32 %v1734, %v1735
  %v1737 = vrot.slane %v1736, 1
  %v1738 = vadd.f32 %v1736, %v1737
  %s1739 = vtos %v1738
  %v1740 = vstv %s1739
  %v1741 = vadd.f32 %v1574, %v1740
  %s1742 = scalar_lea.vmem %s3, 5
  %v1743 = vld [vmem:[%s1742] ss:$8 sm:$0x3]
  %v1745 = vlaneseq
  %v1746 = vshrl.u32 %v1745, 7
  %v1747 = vsub.s32 0, %v1746
  %v1748 = vrot.slane %v1743, %v1747
  %v1749 = vlaneseq
  %v1750 = vshrl.u32 %v1749, 7
  %v1751 = vsub.s32 1, %v1750
  %v1752 = vrot.slane %v1743, %v1751
  %v1755 = vmul.f32 %v1424, %v1748
  %v1756 = vmul.f32 %v1425, %v1752
  %v1757 = vmul.f32 %v1426, %v1748
  %v1758 = vmul.f32 %v1427, %v1752
  %v1759 = vmul.f32 %v1428, %v1748
  %v1760 = vmul.f32 %v1429, %v1752
  %v1761 = vmul.f32 %v1430, %v1748
  %v1762 = vmul.f32 %v1431, %v1752
  %v1763 = vmul.f32 %v1432, %v1748
  %v1764 = vmul.f32 %v1433, %v1752
  %v1765 = vmul.f32 %v1434, %v1748
  %v1766 = vmul.f32 %v1435, %v1752
  %v1767 = vmul.f32 %v1436, %v1748
  %v1768 = vmul.f32 %v1437, %v1752
  %v1769 = vmul.f32 %v1438, %v1748
  %v1770 = vmul.f32 %v1439, %v1752
  %v1771 = vadd.f32 %v1755, %v1756
  %1772 = vadd.xlane.f32.xlu0 %v1771
  %v1773 = vpop.xlane.xlu0 %1772
  %v1774 = vadd.f32 %v1757, %v1758
  %1775 = vadd.xlane.f32.xlu0 %v1774
  %v1776 = vpop.xlane.xlu0 %1775
  %v1777 = vadd.f32 %v1759, %v1760
  %1778 = vadd.xlane.f32.xlu0 %v1777
  %v1779 = vpop.xlane.xlu0 %1778
  %v1780 = vadd.f32 %v1761, %v1762
  %1781 = vadd.xlane.f32.xlu0 %v1780
  %v1782 = vpop.xlane.xlu0 %1781
  %v1783 = vadd.f32 %v1763, %v1764
  %1784 = vadd.xlane.f32.xlu0 %v1783
  %v1785 = vpop.xlane.xlu0 %1784
  %v1786 = vadd.f32 %v1765, %v1766
  %1787 = vadd.xlane.f32.xlu0 %v1786
  %v1788 = vpop.xlane.xlu0 %1787
  %v1789 = vadd.f32 %v1767, %v1768
  %1790 = vadd.xlane.f32.xlu0 %v1789
  %v1791 = vpop.xlane.xlu0 %1790
  %v1792 = vadd.f32 %v1769, %v1770
  %1793 = vadd.xlane.f32.xlu0 %v1792
  %v1794 = vpop.xlane.xlu0 %1793
  %v1795 = vsub.f32 %v1344, %v1773
  %v1796 = vsub.f32 %v1345, %v1776
  %v1797 = vsub.f32 %v1346, %v1779
  %v1798 = vsub.f32 %v1347, %v1782
  %v1799 = vsub.f32 %v1348, %v1785
  %v1800 = vsub.f32 %v1349, %v1788
  %v1801 = vsub.f32 %v1350, %v1791
  %v1802 = vsub.f32 %v1351, %v1794
  %v1803 = vand.u32 2147483647, %v1795
  %v1804 = vand.u32 2147483647, %v1796
  %v1805 = vand.u32 2147483647, %v1797
  %v1806 = vand.u32 2147483647, %v1798
  %v1807 = vand.u32 2147483647, %v1799
  %v1808 = vand.u32 2147483647, %v1800
  %v1809 = vand.u32 2147483647, %v1801
  %v1810 = vand.u32 2147483647, %v1802
  %vm1811 = vcmp.lt.f32.partialorder %v1803, 1.0
  %vm1812 = vcmp.lt.f32.partialorder %v1804, 1.0
  %vm1813 = vcmp.lt.f32.partialorder %v1805, 1.0
  %vm1814 = vcmp.lt.f32.partialorder %v1806, 1.0
  %vm1815 = vcmp.lt.f32.partialorder %v1807, 1.0
  %vm1816 = vcmp.lt.f32.partialorder %v1808, 1.0
  %vm1817 = vcmp.lt.f32.partialorder %v1809, 1.0
  %vm1818 = vcmp.lt.f32.partialorder %v1810, 1.0
  %v1819 = vmul.f32 %v1795, 0.5
  %v1820 = vmul.f32 %v1796, 0.5
  %v1821 = vmul.f32 %v1797, 0.5
  %v1822 = vmul.f32 %v1798, 0.5
  %v1823 = vmul.f32 %v1799, 0.5
  %v1824 = vmul.f32 %v1800, 0.5
  %v1825 = vmul.f32 %v1801, 0.5
  %v1826 = vmul.f32 %v1802, 0.5
  %v1827 = vmul.f32 %v1819, %v1795
  %v1828 = vmul.f32 %v1820, %v1796
  %v1829 = vmul.f32 %v1821, %v1797
  %v1830 = vmul.f32 %v1822, %v1798
  %v1831 = vmul.f32 %v1823, %v1799
  %v1832 = vmul.f32 %v1824, %v1800
  %v1833 = vmul.f32 %v1825, %v1801
  %v1834 = vmul.f32 %v1826, %v1802
  %v1835 = vsub.f32 %v1803, 0.5
  %v1836 = vsub.f32 %v1804, 0.5
  %v1837 = vsub.f32 %v1805, 0.5
  %v1838 = vsub.f32 %v1806, 0.5
  %v1839 = vsub.f32 %v1807, 0.5
  %v1840 = vsub.f32 %v1808, 0.5
  %v1841 = vsub.f32 %v1809, 0.5
  %v1842 = vsub.f32 %v1810, 0.5
  %v1843 = vsel %vm1811, %v1827, %v1835
  %v1844 = vsel %vm1812, %v1828, %v1836
  %v1845 = vsel %vm1813, %v1829, %v1837
  %v1846 = vsel %vm1814, %v1830, %v1838
  %v1847 = vsel %vm1815, %v1831, %v1839
  %v1848 = vsel %vm1816, %v1832, %v1840
  %v1849 = vsel %vm1817, %v1833, %v1841
  %v1850 = vsel %vm1818, %v1834, %v1842
  %1859 = vrot.lane.b32.xlu0 %v1843, 126
  %v1860 = vpop.permute.xlu0 %1859
  %1861 = vrot.lane.b32.xlu0 %v1844, 126
  %v1862 = vpop.permute.xlu0 %1861
  %1863 = vrot.lane.b32.xlu0 %v1845, 126
  %v1864 = vpop.permute.xlu0 %1863
  %1865 = vrot.lane.b32.xlu0 %v1846, 126
  %v1866 = vpop.permute.xlu0 %1865
  %1867 = vrot.lane.b32.xlu0 %v1847, 126
  %v1868 = vpop.permute.xlu0 %1867
  %1869 = vrot.lane.b32.xlu0 %v1848, 126
  %v1870 = vpop.permute.xlu0 %1869
  %1871 = vrot.lane.b32.xlu0 %v1849, 126
  %v1872 = vpop.permute.xlu0 %1871
  %1873 = vrot.lane.b32.xlu0 %v1850, 126
  %v1874 = vpop.permute.xlu0 %1873
  %v1883 = vsel %vm426, %v1860, 0.0
  %v1884 = vsel %vm426, %v1862, 0.0
  %v1885 = vadd.f32 %v1883, %v1884
  %v1886 = vsel %vm426, %v1864, 0.0
  %v1887 = vadd.f32 %v1885, %v1886
  %v1888 = vsel %vm426, %v1866, 0.0
  %v1889 = vadd.f32 %v1887, %v1888
  %v1890 = vsel %vm426, %v1868, 0.0
  %v1891 = vadd.f32 %v1889, %v1890
  %v1892 = vsel %vm426, %v1870, 0.0
  %v1893 = vadd.f32 %v1891, %v1892
  %v1894 = vsel %vm426, %v1872, 0.0
  %v1895 = vadd.f32 %v1893, %v1894
  %v1896 = vsel %vm426, %v1874, 0.0
  %v1897 = vadd.f32 %v1895, %v1896
  %1898 = vadd.xlane.f32.xlu0 %v1897
  %v1899 = vpop.xlane.xlu0 %1898
  %v1900 = vrot.slane %v1899, 4
  %v1901 = vadd.f32 %v1899, %v1900
  %v1902 = vrot.slane %v1901, 2
  %v1903 = vadd.f32 %v1901, %v1902
  %v1904 = vrot.slane %v1903, 1
  %v1905 = vadd.f32 %v1903, %v1904
  %s1906 = vtos %v1905
  %v1907 = vstv %s1906
  %v1908 = vadd.f32 %v1741, %v1907
  %v1909 = vmul.f32 %v1908, 0.0026041667
  %v1910 = vmul.f32 %v440, 2.0
  %v1911 = vadd.f32 %v774, %v1910
  %v1912 = vmul.f32 %v1909, 5.0
  %v1913 = vadd.f32 %v1911, %v1912
  %v1914 = vsel %vm210, %v1909, 0.0
  %v1915 = vsel %vm160, %v440, %v1914
  %v1916 = vsel %vm110, %v774, %v1915
  %v1917 = vsel %vm60, %v1913, %v1916
  %1918 = vst [vmem:[%s4] sm:$0xff] %v1917
  // Predicated region
  $region18: #{loss_fn.1} parent=0 // pred_check
    _
  $region19: #{loss_fn.1} parent=0 // pred_check_branch
    %1920 = sbr.rel (0) target = $region21
  $region20: #{loss_fn.1} parent=0 // pred_region
    _
  $region21: #{loss_fn.1} parent=0 // pred_fallthru
    _
  // Predicated region
  $region22: #{loss_fn.1} parent=0 // pred_check
    _
  $region23: #{loss_fn.1} parent=0 // pred_check_branch
    %1922 = sbr.rel (0) target = $region25
  $region24: #{loss_fn.1} parent=0 // pred_region
    _
  $region25: #{loss_fn.1} parent=0 // pred_fallthru
    _

</llo_original>
